<compile_context>
chip_gen: v6e
topology: v6e:2x2x1
jax: 0.10.0
libtpu: 0.0.40
codegen_flags: <defaults>
</compile_context>

<pallas_src>
import jax
import jax.numpy as jnp
from jax.experimental import pallas as pl
from jax.experimental.pallas import tpu as pltpu


def _round_up(x, m):
    return (x + m - 1) // m * m


# --------------------------- fused kernel ------------------------------------
def _make_fused_kernel(hw_true):
    inv_hw = 1.0 / float(hw_true)   # static: mean over the TRUE (unpadded) HW

    def kernel(patches_ref, w_ref, wcls_ref, out_ref):
        # grid = (batch_tiles, branch) -- both "parallel"; no cross-step state.
        p = patches_ref[...]                     # (nb, HWp, Kp)   bf16
        nb, hwp, kp = p.shape
        w = w_ref[...]                           # (Kp, Cp)        bf16

        # conv-as-matmul on the MXU, fp32 accumulation; ReLU per row BEFORE
        # pooling (required for mean(relu(.)) correctness).
        y = jnp.dot(p.reshape(nb * hwp, kp), w,
                    preferred_element_type=jnp.float32)       # (nb*hwp, Cp) f32
        y = jnp.maximum(y, 0.0)

        # global average pool over the TRUE HW (padded rows are exact zeros).
        feat = jnp.sum(y.reshape(nb, hwp, -1), axis=1) * inv_hw   # (nb, Cp) f32

        # this branch's half of  cat([f1, f2], -1) @ Wcls  == f_g @ Wcls[g*C:(g+1)*C]
        # (bias and the cross-branch sum are added in the wrapper).
        out_ref[...] = jnp.dot(feat.astype(wcls_ref.dtype), wcls_ref[...],
                               preferred_element_type=jnp.float32)   # (nb, NCp)

    return kernel


def fused_two_branch(patches1, patches2, w1_mat, w2_mat, cls_w_t, cls_b,
                     *, nb=8, compute_dtype=jnp.bfloat16):
    B, HW, K = patches1.shape
    C = w1_mat.shape[1]
    NC = cls_w_t.shape[1]

    LANE = 128
    SUB = 16                                  # bf16 sublane packing
    nb = min(nb, _round_up(B, 8))
    Bp = _round_up(B, nb)
    HWp = _round_up(HW, SUB)                  # keeps the in-kernel reshape a no-op
    Kp = _round_up(K, 32)                     # dominant HBM stream: do NOT pad to 128
    Cp = _round_up(C, LANE)
    NCp = _round_up(NC, LANE)

    def pad_patches(p):
        return jnp.pad(p, ((0, Bp - B), (0, HWp - HW), (0, Kp - K)))

    # zero padding is exact: padded K cols / HW rows / C cols all contribute 0.
    patches = jnp.stack([pad_patches(patches1),
                         pad_patches(patches2)]).astype(compute_dtype)  # (2,Bp,HWp,Kp)
    w = jnp.stack([jnp.pad(w1_mat, ((0, Kp - K), (0, Cp - C))),
                   jnp.pad(w2_mat, ((0, Kp - K), (0, Cp - C)))]
                  ).astype(compute_dtype)                               # (2,Kp,Cp)
    wcls = jnp.stack([jnp.pad(cls_w_t[:C], ((0, Cp - C), (0, NCp - NC))),
                      jnp.pad(cls_w_t[C:], ((0, Cp - C), (0, NCp - NC)))]
                     ).astype(compute_dtype)                            # (2,Cp,NCp)

    grid = (Bp // nb, 2)

    cost = pl.CostEstimate(
        flops=2 * 2 * Bp * HWp * Kp * Cp + 2 * 2 * Bp * Cp * NCp,
        transcendentals=0,
        bytes_accessed=(patches.size * patches.dtype.itemsize
                        + w.size * w.dtype.itemsize
                        + wcls.size * wcls.dtype.itemsize
                        + 2 * Bp * NCp * 4),
    )

    partial = pl.pallas_call(
        _make_fused_kernel(HW),
        out_shape=jax.ShapeDtypeStruct((2, Bp, NCp), jnp.float32),
        grid_spec=pltpu.PrefetchScalarGridSpec(
            num_scalar_prefetch=0,
            grid=grid,
            in_specs=[
                # last dim == full array dim -> (8,128) exemption; the block
                # covers dims 2,3 fully so each DMA is one contiguous slab.
                pl.BlockSpec((None, nb, HWp, Kp), lambda b, g: (g, b, 0, 0)),
                pl.BlockSpec((None, Kp, Cp),      lambda b, g: (g, 0, 0)),
                pl.BlockSpec((None, Cp, NCp),     lambda b, g: (g, 0, 0)),
            ],
            out_specs=pl.BlockSpec((None, nb, NCp), lambda b, g: (g, b, 0)),
        ),
        compiler_params=pltpu.CompilerParams(
            dimension_semantics=("parallel", "parallel"),
            vmem_limit_bytes=48 * 1024 * 1024,
        ),
        cost_estimate=cost,
    )(patches, w, wcls)

    # tiny epilogue in the wrapper (per review): sum the two branch partials
    # and add the classifier bias, then strip padding.
    logits = partial[0, :B, :NC] + partial[1, :B, :NC] + cls_b[None, :]
    return logits


# ------------------------------ JAX glue --------------------------------------
def im2col_3x3(x_nhwc):
    # 3x3, stride 1, padding 1 (same) patches: (B, H, W, C) -> (B, H*W, 9*C)
    B, H, W, C = x_nhwc.shape
    xp = jnp.pad(x_nhwc, ((0, 0), (1, 1), (1, 1), (0, 0)))
    cols = []
    for dy in range(3):
        for dx in range(3):
            cols.append(xp[:, dy:dy + H, dx:dx + W, :])
    return jnp.concatenate(cols, axis=-1).reshape(B, H * W, 9 * C)


def conv_weight_to_matmul(w_oihw):
    # PyTorch conv weight (Cout, Cin, 3, 3) -> (9*Cin, Cout), tap order matching im2col.
    return jnp.transpose(w_oihw, (2, 3, 1, 0)).reshape(-1, w_oihw.shape[0])


def two_branch_forward(params, x_nchw, att_nchw):
    p1 = im2col_3x3(jnp.transpose(x_nchw, (0, 2, 3, 1)))
    p2 = im2col_3x3(jnp.transpose(att_nchw, (0, 2, 3, 1)))
    return fused_two_branch(p1, p2, params["w1_mat"], params["w2_mat"],
                            params["cls_w_t"], params["cls_b"])


def two_branch_reference(params, x_nchw, att_nchw, compute_dtype=jnp.bfloat16):
    # Pure-JAX reference of the same math (same bf16 operand casts, f32 accum).
    def branch_feat(x, w_mat):
        p = im2col_3x3(jnp.transpose(x, (0, 2, 3, 1))).astype(compute_dtype)
        w = w_mat.astype(compute_dtype)
        y = jnp.einsum("bpk,kc->bpc", p, w, preferred_element_type=jnp.float32)
        y = jnp.maximum(y, 0.0)
        return jnp.mean(y, axis=1)                                    # (B, C) f32

    C = params["w1_mat"].shape[1]
    f1 = branch_feat(x_nchw, params["w1_mat"]).astype(compute_dtype)
    f2 = branch_feat(att_nchw, params["w2_mat"]).astype(compute_dtype)
    wcls = params["cls_w_t"].astype(compute_dtype)
    z = (jnp.dot(f1, wcls[:C], preferred_element_type=jnp.float32)
         + jnp.dot(f2, wcls[C:], preferred_element_type=jnp.float32))
    return z + params["cls_b"]


# -------------------------------- main ----------------------------------------
if __name__ == "__main__":
    key = jax.random.PRNGKey(0)
    k_x, k_att, k_w1, k_w2, k_cw, k_cb = jax.random.split(key, 6)

    B, Cin, H, W = 2, 3, 16, 16          # small stand-in for (B, 3, 224, 224)
    channels = 32                        # stand-in for ResNet-50's 2048
    num_classes = 10

    x = jax.random.normal(k_x, (B, Cin, H, W), dtype=jnp.float32)
    att = jax.random.normal(k_att, (B, Cin, H, W), dtype=jnp.float32)

    # Deterministic synthetic parameters (module __init__ shapes, scaled down).
    w1_oihw = 0.1 * jax.random.normal(k_w1, (channels, Cin, 3, 3), dtype=jnp.float32)
    w2_oihw = 0.1 * jax.random.normal(k_w2, (channels, Cin, 3, 3), dtype=jnp.float32)
    cls_w = 0.1 * jax.random.normal(k_cw, (num_classes, channels * 2), dtype=jnp.float32)
    cls_b = 0.1 * jax.random.normal(k_cb, (num_classes,), dtype=jnp.float32)

    params = {
        "w1_mat": conv_weight_to_matmul(w1_oihw),   # (9*Cin, channels)
        "w2_mat": conv_weight_to_matmul(w2_oihw),   # (9*Cin, channels)
        "cls_w_t": cls_w.T,                         # (2*channels, num_classes)
        "cls_b": cls_b,                             # (num_classes,)
    }

    out = jax.jit(two_branch_forward)(params, x, att)
    out = jax.block_until_ready(out)

    ref = two_branch_reference(params, x, att)
    assert out.shape == (B, num_classes)
    assert jnp.allclose(out, ref, atol=5e-3, rtol=5e-3), "mismatch vs reference"

    print("KERNEL_OK")
</pallas_src>

<mosaic_0001>
module attributes {stable_mosaic.version = 11 : i64} {
  func.func @kernel(%arg0: i32, %arg1: i32, %arg2: memref<1x8x256x32xbf16, #tpu.memory_space<vmem>>, %arg3: memref<1x32x128xbf16, #tpu.memory_space<vmem>>, %arg4: memref<1x128x128xbf16, #tpu.memory_space<vmem>>, %arg5: memref<1x8x128xf32, #tpu.memory_space<vmem>>) attributes {dimension_semantics = [#tpu.dimension_semantics<parallel>, #tpu.dimension_semantics<parallel>], iteration_bounds = array<i64: 1, 2>, scalar_prefetch = 0 : i64, scratch_operands = 0 : i64, tpu.core_type = #tpu.core_type<tc>, window_params = [{transform_indices = @transform_0, window_bounds = array<i64: 1, 8, 256, 32>}, {transform_indices = @transform_1, window_bounds = array<i64: 1, 32, 128>}, {transform_indices = @transform_2, window_bounds = array<i64: 1, 128, 128>}, {transform_indices = @transform_3, window_bounds = array<i64: 1, 8, 128>}]} {
    %c0 = arith.constant 0 : index
    %c0_0 = arith.constant 0 : index
    %c0_1 = arith.constant 0 : index
    %c0_2 = arith.constant 0 : index
    %0 = vector.load %arg2[%c0, %c0_0, %c0_1, %c0_2] : memref<1x8x256x32xbf16, #tpu.memory_space<vmem>>, vector<1x8x256x32xbf16>
    %1 = vector.shape_cast %0 : vector<1x8x256x32xbf16> to vector<8x256x32xbf16>
    %c0_3 = arith.constant 0 : index
    %c0_4 = arith.constant 0 : index
    %c0_5 = arith.constant 0 : index
    %2 = vector.load %arg3[%c0_3, %c0_4, %c0_5] : memref<1x32x128xbf16, #tpu.memory_space<vmem>>, vector<1x32x128xbf16>
    %3 = vector.shape_cast %2 : vector<1x32x128xbf16> to vector<32x128xbf16>
    %4 = vector.shape_cast %1 : vector<8x256x32xbf16> to vector<2048x32xbf16>
    %cst = arith.constant dense<0.000000e+00> : vector<2048x128xf32>
    %5 = tpu.matmul %4, %3, %cst {dimension_numbers = #tpu.dot_dimension_numbers<[1], [0], [0], [1], [0, 0, 1, 1], [], []>} : vector<2048x32xbf16>, vector<32x128xbf16>, vector<2048x128xf32> -> vector<2048x128xf32>
    %cst_6 = arith.constant 0.000000e+00 : f32
    %6 = vector.broadcast %cst_6 : f32 to vector<2048x128xf32>
    %7 = arith.maximumf %5, %6 : vector<2048x128xf32>
    %8 = vector.shape_cast %7 : vector<2048x128xf32> to vector<8x256x128xf32>
    %cst_7 = arith.constant dense<0.000000e+00> : vector<8x128xf32>
    %9 = vector.multi_reduction <add>, %8, %cst_7 [1] : vector<8x256x128xf32> to vector<8x128xf32>
    %cst_8 = arith.constant 3.906250e-03 : f32
    %10 = vector.broadcast %cst_8 : f32 to vector<8x128xf32>
    %11 = arith.mulf %9, %10 : vector<8x128xf32>
    %12 = arith.truncf %11 : vector<8x128xf32> to vector<8x128xbf16>
    %c0_9 = arith.constant 0 : index
    %c0_10 = arith.constant 0 : index
    %c0_11 = arith.constant 0 : index
    %13 = vector.load %arg4[%c0_9, %c0_10, %c0_11] : memref<1x128x128xbf16, #tpu.memory_space<vmem>>, vector<1x128x128xbf16>
    %14 = vector.shape_cast %13 : vector<1x128x128xbf16> to vector<128x128xbf16>
    %cst_12 = arith.constant dense<0.000000e+00> : vector<8x128xf32>
    %15 = tpu.matmul %12, %14, %cst_12 {dimension_numbers = #tpu.dot_dimension_numbers<[1], [0], [0], [1], [0, 0, 1, 1], [], []>} : vector<8x128xbf16>, vector<128x128xbf16>, vector<8x128xf32> -> vector<8x128xf32>
    %c0_13 = arith.constant 0 : index
    %c0_14 = arith.constant 0 : index
    %c0_15 = arith.constant 0 : index
    %16 = vector.load %arg5[%c0_13, %c0_14, %c0_15] : memref<1x8x128xf32, #tpu.memory_space<vmem>>, vector<1x8x128xf32>
    %17 = vector.shape_cast %16 : vector<1x8x128xf32> to vector<8x128xf32>
    %18 = vector.shape_cast %15 : vector<8x128xf32> to vector<1x8x128xf32>
    tpu.vector_store %arg5[%c0_13, %c0_14, %c0_15], %18 {strides = array<i32>} : memref<1x8x128xf32, #tpu.memory_space<vmem>>, vector<1x8x128xf32>,
    return
  }
  func.func @transform_0(%arg0: i32, %arg1: i32) -> (i32, i32, i32, i32) {
    %c0_i32 = arith.constant 0 : i32
    %c0_i32_0 = arith.constant 0 : i32
    %c0_i32_1 = arith.constant 0 : i32
    return %arg1, %arg0, %c0_i32, %c0_i32_0 : i32, i32, i32, i32
  }
  func.func @transform_1(%arg0: i32, %arg1: i32) -> (i32, i32, i32) {
    %c0_i32 = arith.constant 0 : i32
    %c0_i32_0 = arith.constant 0 : i32
    %c0_i32_1 = arith.constant 0 : i32
    return %arg1, %c0_i32, %c0_i32_0 : i32, i32, i32
  }
  func.func @transform_2(%arg0: i32, %arg1: i32) -> (i32, i32, i32) {
    %c0_i32 = arith.constant 0 : i32
    %c0_i32_0 = arith.constant 0 : i32
    %c0_i32_1 = arith.constant 0 : i32
    return %arg1, %c0_i32, %c0_i32_0 : i32, i32, i32
  }
  func.func @transform_3(%arg0: i32, %arg1: i32) -> (i32, i32, i32) {
    %c0_i32 = arith.constant 0 : i32
    %c0_i32_0 = arith.constant 0 : i32
    return %arg1, %arg0, %c0_i32 : i32, i32, i32
  }
}

</mosaic_0001>

<llo_original>
// kernel: two_branch_forward.1
$region0: #{two_branch_forward.1}
  #allocation0 [shape = 'u32[]', space=smem, size = 0x4, offset = 0x4, fixed_abs, tag = 'smem constant byte address 0x4 - core index']
  #allocation1 [shape = 'u32[144,128]{1,0:T(1,128)}', space=vmem, size = 0x12000, scoped, tag = 'internal scratch']
  %s0 = inlined_call_operand.vmem [shape: bf16[2,8,256,32], index: 0, kind: input, shape index: {}]
  %s1 = inlined_call_operand.vmem [shape: bf16[2,32,128], index: 1, kind: input, shape index: {}]
  %s2 = inlined_call_operand.vmem [shape: bf16[2,128,128], index: 2, kind: input, shape index: {}]
  %s3 = inlined_call_operand.vmem [shape: f32[2,8,128], index: 3, kind: output, shape index: {}]
  %s4 = sld [smem:[#allocation0]]
  $region45: #{two_branch_forward.1} parent=0
    _
  %s6 = ssub.s32 1, %s4
  %s7 = scalar_select 0, %s6, %s4
  loop: start=0, step=1, limit=4
  $region2: #{two_branch_forward.1} parent=0 // loop_pre_header
    _
  $region3: #{two_branch_forward.1} parent=0 // loop_header
    %s9 = sphi 0, %s13
    %p10 = scmp.ge.s32.totalorder %s9, 4
    %s16 = sphi 0, %s28
    %s17 = sphi 0, %s24
    %s18 = sphi 0, %s16
    %s19 = sphi 0, %s17
    %s20 = sphi 0, %s18
    %s21 = sphi 0, %s19
    %s33 = sphi 0, %s35
    %s36 = sphi 0, %s33
    %s37 = sphi 0, %s36
    %s53 = sphi 0, %s37
    %s59 = sphi 0, %s61
    %s62 = sphi 0, %s59
    %s63 = sphi 0, %s62
    %s79 = sphi 0, %s63
    %s85 = sphi 0, %s87
    %s88 = sphi 0, %s85
    %s89 = sphi 0, %s88
    %s105 = sphi 0, %s89
    %s113 = sphi 0, %s115
    %s116 = sphi 0, %s113
    %s117 = sphi 0, %s116
    %s133 = sphi 0, %s117
  $region4: #{two_branch_forward.1} parent=0 // loop_header_branch
    %12 = sbr.rel (%p10) target = $region8
  $region5: #{two_branch_forward.1} parent=0 // loop_body
    %s14 = ssub.s32 %s9, 1
    %s15 = ssub.s32 %s9, 2
    %s22 = sadd.s32 1, %s17
    %p23 = scmp.ge.s32.totalorder %s22, 2
    %s24 = scalar_select %p23, 0, %s22
    %s25 = sadd.s32 1, %s16
    %s26 = scalar_select %p23, %s25, %s16
    %p27 = scmp.ge.s32.totalorder %s26, 1
    %s28 = scalar_select %p27, 0, %s26
    %s29 = ssub.s32 %s17, %s24
    %s30 = ssub.s32 %s16, %s28
    %s31 = sor.u32 %s29, %s30
    %p32 = scmp.eq.s32.totalorder %s31, 0
    %s34 = sadd.s32 %s33, 1
    %s35 = scalar_select %p32, %s33, %s34
    %p38 = pneg %p32
    %p39 = scmp.eq.s32.totalorder %s9, 1
    %p40 = por %p38, %p39
    %p41 = scmp.ne.s32.totalorder %s33, %s36
    %p42 = scmp.eq.s32.totalorder %s9, 0
    %p43 = por %p41, %p42
    %p44 = scmp.ne.s32.totalorder %s33, %s36
    %p45 = scmp.eq.s32.totalorder %s14, 1
    %p46 = por %p44, %p45
    %p47 = scmp.ne.s32.totalorder %s36, %s37
    %p48 = scmp.eq.s32.totalorder %s14, 0
    %p49 = por %p47, %p48
    %p50 = scmp.ne.s32.totalorder %s36, %s37
    %p51 = scmp.eq.s32.totalorder %s15, 1
    %p52 = por %p50, %p51
    %p54 = scmp.ne.s32.totalorder %s37, %s53
    %p55 = scmp.eq.s32.totalorder %s15, 0
    %p56 = por %p54, %p55
    %s57 = ssub.s32 %s17, %s24
    %p58 = scmp.eq.s32.totalorder %s57, 0
    %s60 = sadd.s32 %s59, 1
    %s61 = scalar_select %p58, %s59, %s60
    %p64 = pneg %p58
    %p65 = scmp.eq.s32.totalorder %s9, 1
    %p66 = por %p64, %p65
    %p67 = scmp.ne.s32.totalorder %s59, %s62
    %p68 = scmp.eq.s32.totalorder %s9, 0
    %p69 = por %p67, %p68
    %p70 = scmp.ne.s32.totalorder %s59, %s62
    %p71 = scmp.eq.s32.totalorder %s14, 1
    %p72 = por %p70, %p71
    %p73 = scmp.ne.s32.totalorder %s62, %s63
    %p74 = scmp.eq.s32.totalorder %s14, 0
    %p75 = por %p73, %p74
    %p76 = scmp.ne.s32.totalorder %s62, %s63
    %p77 = scmp.eq.s32.totalorder %s15, 1
    %p78 = por %p76, %p77
    %p80 = scmp.ne.s32.totalorder %s63, %s79
    %p81 = scmp.eq.s32.totalorder %s15, 0
    %p82 = por %p80, %p81
    %s83 = ssub.s32 %s17, %s24
    %p84 = scmp.eq.s32.totalorder %s83, 0
    %s86 = sadd.s32 %s85, 1
    %s87 = scalar_select %p84, %s85, %s86
    %p90 = pneg %p84
    %p91 = scmp.eq.s32.totalorder %s9, 1
    %p92 = por %p90, %p91
    %p93 = scmp.ne.s32.totalorder %s85, %s88
    %p94 = scmp.eq.s32.totalorder %s9, 0
    %p95 = por %p93, %p94
    %p96 = scmp.ne.s32.totalorder %s85, %s88
    %p97 = scmp.eq.s32.totalorder %s14, 1
    %p98 = por %p96, %p97
    %p99 = scmp.ne.s32.totalorder %s88, %s89
    %p100 = scmp.eq.s32.totalorder %s14, 0
    %p101 = por %p99, %p100
    %p102 = scmp.ne.s32.totalorder %s88, %s89
    %p103 = scmp.eq.s32.totalorder %s15, 1
    %p104 = por %p102, %p103
    %p106 = scmp.ne.s32.totalorder %s89, %s105
    %p107 = scmp.eq.s32.totalorder %s15, 0
    %p108 = por %p106, %p107
    %s109 = ssub.s32 %s17, %s24
    %s110 = ssub.s32 %s16, %s28
    %s111 = sor.u32 %s109, %s110
    %p112 = scmp.eq.s32.totalorder %s111, 0
    %s114 = sadd.s32 %s113, 1
    %s115 = scalar_select %p112, %s113, %s114
    %p118 = pneg %p112
    %p119 = scmp.eq.s32.totalorder %s9, 1
    %p120 = por %p118, %p119
    %p121 = scmp.ne.s32.totalorder %s113, %s116
    %p122 = scmp.eq.s32.totalorder %s9, 0
    %p123 = por %p121, %p122
    %p124 = scmp.ne.s32.totalorder %s113, %s116
    %p125 = scmp.eq.s32.totalorder %s14, 1
    %p126 = por %p124, %p125
    %p127 = scmp.ne.s32.totalorder %s116, %s117
    %p128 = scmp.eq.s32.totalorder %s14, 0
    %p129 = por %p127, %p128
    %p130 = scmp.ne.s32.totalorder %s116, %s117
    %p131 = scmp.eq.s32.totalorder %s15, 1
    %p132 = por %p130, %p131
    %p134 = scmp.ne.s32.totalorder %s117, %s133
    %p135 = scmp.eq.s32.totalorder %s15, 0
    %p136 = por %p134, %p135
    %p137 = scmp.le.s32.totalorder 1, %s9
    %p138 = scmp.lt.s32.totalorder %s9, 3
    %p139 = pnand %p137, %p138
    %p140 = pneg %p139
    // Predicated region
    $region9: #{two_branch_forward.1} parent=5 // pred_check
      _
    $region10: #{two_branch_forward.1} parent=5 // pred_check_branch
      %142 = sbr.rel (%p139) target = $region12
    $region11: #{two_branch_forward.1} parent=5 // pred_region
      %s143 = ssub.s32 %s9, 1
    $region12: #{two_branch_forward.1} parent=5 // pred_fallthru
      _
    %p144 = scmp.lt.s32.totalorder %s9, 2
    // Predicated region
    $region13: #{two_branch_forward.1} parent=5 // pred_check
      %p145 = pneg %p144
    $region14: #{two_branch_forward.1} parent=5 // pred_check_branch
      %147 = sbr.rel (%p145) target = $region16
    $region15: #{two_branch_forward.1} parent=5 // pred_region
      // Predicated region
      $region17: #{two_branch_forward.1} parent=15 // pred_check
        %p148 = pneg %p43
      $region18: #{two_branch_forward.1} parent=15 // pred_check_branch
        %150 = sbr.rel (%p148) target = $region20
      $region19: #{two_branch_forward.1} parent=15 // pred_region
        %s151 = smul.u32 8, %s16
        %p152 = scmp.lt.s32.totalorder %s17, 1
        %s153 = scalar_select %p152, %s17, 1
        %p154 = scmp.lt.s32.totalorder %s151, 7
        %s155 = scalar_select %p154, %s151, 7
        %s156 = smul.addr %s155, 32
        %s157 = smul.addr %s153, 256
        %s158 = sadd.s32 %s156, %s157
        %s159 = smul.addr %s158, 4
        %s160 = scalar_lea.vmem %s0, %s159
        %s161 = smul.u32 8, %s16
      $region20: #{two_branch_forward.1} parent=15 // pred_fallthru
        _
      // Predicated region
      $region21: #{two_branch_forward.1} parent=15 // pred_check
        %p162 = pneg %p69
      $region22: #{two_branch_forward.1} parent=15 // pred_check_branch
        %164 = sbr.rel (%p162) target = $region24
      $region23: #{two_branch_forward.1} parent=15 // pred_region
        %p165 = scmp.lt.s32.totalorder %s17, 1
        %s166 = scalar_select %p165, %s17, 1
        %s167 = smul.addr %s166, 4
        %s168 = smul.addr %s167, 4
        %s169 = scalar_lea.vmem %s1, %s168
      $region24: #{two_branch_forward.1} parent=15 // pred_fallthru
        _
      // Predicated region
      $region25: #{two_branch_forward.1} parent=15 // pred_check
        %p170 = pneg %p95
      $region26: #{two_branch_forward.1} parent=15 // pred_check_branch
        %172 = sbr.rel (%p170) target = $region28
      $region27: #{two_branch_forward.1} parent=15 // pred_region
        %p173 = scmp.lt.s32.totalorder %s17, 1
        %s174 = scalar_select %p173, %s17, 1
        %s175 = smul.addr %s174, 16
        %s176 = smul.addr %s175, 4
        %s177 = scalar_lea.vmem %s2, %s176
      $region28: #{two_branch_forward.1} parent=15 // pred_fallthru
        _
    $region16: #{two_branch_forward.1} parent=5 // pred_fallthru
      _
    %p178 = scmp.le.s32.totalorder 1, %s9
    %p179 = scmp.lt.s32.totalorder %s9, 3
    %p180 = pnand %p178, %p179
    %p181 = pneg %p180
    // Predicated region
    $region29: #{two_branch_forward.1} parent=5 // pred_check
      _
    $region30: #{two_branch_forward.1} parent=5 // pred_check_branch
      %183 = sbr.rel (%p180) target = $region32
    $region31: #{two_branch_forward.1} parent=5 // pred_region
      %s184 = ssub.s32 %s9, 1
      %s185 = smul.u32 8, %s18
      %p186 = scmp.lt.s32.totalorder %s19, 1
      %s187 = scalar_select %p186, %s19, 1
      %p188 = scmp.lt.s32.totalorder %s185, 7
      %s189 = scalar_select %p188, %s185, 7
      %s190 = smul.addr %s189, 32
      %s191 = smul.addr %s187, 256
      %s192 = sadd.s32 %s190, %s191
      %s193 = smul.addr %s192, 4
      %s194 = scalar_lea.vmem %s0, %s193
      %p195 = pneg %p49
      %p196 = pneg %p46
      %p197 = scmp.lt.s32.totalorder %s19, 1
      %s198 = scalar_select %p197, %s19, 1
      %s199 = smul.addr %s198, 4
      %s200 = smul.addr %s199, 4
      %s201 = scalar_lea.vmem %s1, %s200
      %p202 = pneg %p75
      %p203 = pneg %p72
      %p204 = scmp.lt.s32.totalorder %s19, 1
      %s205 = scalar_select %p204, %s19, 1
      %s206 = smul.addr %s205, 16
      %s207 = smul.addr %s206, 4
      %s208 = scalar_lea.vmem %s2, %s207
      %p209 = pneg %p101
      %p210 = pneg %p98
      %p211 = pneg %p129
      %p212 = pneg %p126
      %p213 = scmp.lt.s32.totalorder %s19, 1
      %s214 = scalar_select %p213, %s19, 1
      %p215 = scmp.lt.s32.totalorder %s18, 0
      %s216 = scalar_select %p215, %s18, 0
      %s217 = sadd.s32 %s216, %s214
      %s218 = smul.addr %s217, 8
      %s219 = scalar_lea.vmem %s3, %s218
      %s220 = smul.u32 8, %s18
      %p221 = scmp.lt.s32.totalorder %s19, 1
      %s222 = scalar_select %p221, %s19, 1
      %p223 = scmp.lt.s32.totalorder %s220, 7
      %s224 = scalar_select %p223, %s220, 7
      %s225 = smul.addr %s224, 32
      %s226 = smul.addr %s222, 256
      %s227 = sadd.s32 %s225, %s226
      %s228 = smul.addr %s227, 4
      %s229 = scalar_lea.vmem %s0, %s228
      %s230 = smul.u32 8, %s18
      %p231 = scmp.lt.s32.totalorder %s19, 1
      %s232 = scalar_select %p231, %s19, 1
      %s233 = smul.addr %s232, 4
      %s234 = smul.addr %s233, 4
      %s235 = scalar_lea.vmem %s1, %s234
      %p236 = scmp.lt.s32.totalorder %s19, 1
      %s237 = scalar_select %p236, %s19, 1
      %s238 = smul.addr %s237, 16
      %s239 = smul.addr %s238, 4
      %s240 = scalar_lea.vmem %s2, %s239
      %p241 = scmp.lt.s32.totalorder %s19, 1
      %s242 = scalar_select %p241, %s19, 1
      %p243 = scmp.lt.s32.totalorder %s18, 0
      %s244 = scalar_select %p243, %s18, 0
      %s245 = sadd.s32 %s244, %s242
      %s246 = smul.addr %s245, 8
      %s247 = scalar_lea.vmem %s3, %s246
      %v249 = vld [vmem:[%s229] sm:$0xf]
      %v250 = vld [vmem:[%s229 + $0x4] sm:$0xf]
      %v251 = vld [vmem:[%s229 + $0x8] sm:$0xf]
      %v252 = vld [vmem:[%s229 + $0xc] sm:$0xf]
      %v253 = vld [vmem:[%s229 + $0x10] sm:$0xf]
      %v254 = vld [vmem:[%s229 + $0x14] sm:$0xf]
      %v255 = vld [vmem:[%s229 + $0x18] sm:$0xf]
      %v256 = vld [vmem:[%s229 + $0x1c] sm:$0xf]
      %v257 = vld [vmem:[%s229 + $0x20] sm:$0xf]
      %v258 = vld [vmem:[%s229 + $0x24] sm:$0xf]
      %v259 = vld [vmem:[%s229 + $0x28] sm:$0xf]
      %v260 = vld [vmem:[%s229 + $0x2c] sm:$0xf]
      %v261 = vld [vmem:[%s229 + $0x30] sm:$0xf]
      %v262 = vld [vmem:[%s229 + $0x34] sm:$0xf]
      %v263 = vld [vmem:[%s229 + $0x38] sm:$0xf]
      %v264 = vld [vmem:[%s229 + $0x3c] sm:$0xf]
      %v265 = vld [vmem:[%s229 + $0x40] sm:$0xf]
      %v266 = vld [vmem:[%s229 + $0x44] sm:$0xf]
      %v267 = vld [vmem:[%s229 + $0x48] sm:$0xf]
      %v268 = vld [vmem:[%s229 + $0x4c] sm:$0xf]
      %v269 = vld [vmem:[%s229 + $0x50] sm:$0xf]
      %v270 = vld [vmem:[%s229 + $0x54] sm:$0xf]
      %v271 = vld [vmem:[%s229 + $0x58] sm:$0xf]
      %v272 = vld [vmem:[%s229 + $0x5c] sm:$0xf]
      %v273 = vld [vmem:[%s229 + $0x60] sm:$0xf]
      %v274 = vld [vmem:[%s229 + $0x64] sm:$0xf]
      %v275 = vld [vmem:[%s229 + $0x68] sm:$0xf]
      %v276 = vld [vmem:[%s229 + $0x6c] sm:$0xf]
      %v277 = vld [vmem:[%s229 + $0x70] sm:$0xf]
      %v278 = vld [vmem:[%s229 + $0x74] sm:$0xf]
      %v279 = vld [vmem:[%s229 + $0x78] sm:$0xf]
      %v280 = vld [vmem:[%s229 + $0x7c] sm:$0xf]
      %v281 = vld [vmem:[%s229 + $0x80] sm:$0xf]
      %v282 = vld [vmem:[%s229 + $0x84] sm:$0xf]
      %v283 = vld [vmem:[%s229 + $0x88] sm:$0xf]
      %v284 = vld [vmem:[%s229 + $0x8c] sm:$0xf]
      %v285 = vld [vmem:[%s229 + $0x90] sm:$0xf]
      %v286 = vld [vmem:[%s229 + $0x94] sm:$0xf]
      %v287 = vld [vmem:[%s229 + $0x98] sm:$0xf]
      %v288 = vld [vmem:[%s229 + $0x9c] sm:$0xf]
      %v289 = vld [vmem:[%s229 + $0xa0] sm:$0xf]
      %v290 = vld [vmem:[%s229 + $0xa4] sm:$0xf]
      %v291 = vld [vmem:[%s229 + $0xa8] sm:$0xf]
      %v292 = vld [vmem:[%s229 + $0xac] sm:$0xf]
      %v293 = vld [vmem:[%s229 + $0xb0] sm:$0xf]
      %v294 = vld [vmem:[%s229 + $0xb4] sm:$0xf]
      %v295 = vld [vmem:[%s229 + $0xb8] sm:$0xf]
      %v296 = vld [vmem:[%s229 + $0xbc] sm:$0xf]
      %v297 = vld [vmem:[%s229 + $0xc0] sm:$0xf]
      %v298 = vld [vmem:[%s229 + $0xc4] sm:$0xf]
      %v299 = vld [vmem:[%s229 + $0xc8] sm:$0xf]
      %v300 = vld [vmem:[%s229 + $0xcc] sm:$0xf]
      %v301 = vld [vmem:[%s229 + $0xd0] sm:$0xf]
      %v302 = vld [vmem:[%s229 + $0xd4] sm:$0xf]
      %v303 = vld [vmem:[%s229 + $0xd8] sm:$0xf]
      %v304 = vld [vmem:[%s229 + $0xdc] sm:$0xf]
      %v305 = vld [vmem:[%s229 + $0xe0] sm:$0xf]
      %v306 = vld [vmem:[%s229 + $0xe4] sm:$0xf]
      %v307 = vld [vmem:[%s229 + $0xe8] sm:$0xf]
      %v308 = vld [vmem:[%s229 + $0xec] sm:$0xf]
      %v309 = vld [vmem:[%s229 + $0xf0] sm:$0xf]
      %v310 = vld [vmem:[%s229 + $0xf4] sm:$0xf]
      %v311 = vld [vmem:[%s229 + $0xf8] sm:$0xf]
      %v312 = vld [vmem:[%s229 + $0xfc] sm:$0xf]
      %v313 = vld [vmem:[%s229 + $0x100] sm:$0xf]
      %v314 = vld [vmem:[%s229 + $0x104] sm:$0xf]
      %v315 = vld [vmem:[%s229 + $0x108] sm:$0xf]
      %v316 = vld [vmem:[%s229 + $0x10c] sm:$0xf]
      %v317 = vld [vmem:[%s229 + $0x110] sm:$0xf]
      %v318 = vld [vmem:[%s229 + $0x114] sm:$0xf]
      %v319 = vld [vmem:[%s229 + $0x118] sm:$0xf]
      %v320 = vld [vmem:[%s229 + $0x11c] sm:$0xf]
      %v321 = vld [vmem:[%s229 + $0x120] sm:$0xf]
      %v322 = vld [vmem:[%s229 + $0x124] sm:$0xf]
      %v323 = vld [vmem:[%s229 + $0x128] sm:$0xf]
      %v324 = vld [vmem:[%s229 + $0x12c] sm:$0xf]
      %v325 = vld [vmem:[%s229 + $0x130] sm:$0xf]
      %v326 = vld [vmem:[%s229 + $0x134] sm:$0xf]
      %v327 = vld [vmem:[%s229 + $0x138] sm:$0xf]
      %v328 = vld [vmem:[%s229 + $0x13c] sm:$0xf]
      %v329 = vld [vmem:[%s229 + $0x140] sm:$0xf]
      %v330 = vld [vmem:[%s229 + $0x144] sm:$0xf]
      %v331 = vld [vmem:[%s229 + $0x148] sm:$0xf]
      %v332 = vld [vmem:[%s229 + $0x14c] sm:$0xf]
      %v333 = vld [vmem:[%s229 + $0x150] sm:$0xf]
      %v334 = vld [vmem:[%s229 + $0x154] sm:$0xf]
      %v335 = vld [vmem:[%s229 + $0x158] sm:$0xf]
      %v336 = vld [vmem:[%s229 + $0x15c] sm:$0xf]
      %v337 = vld [vmem:[%s229 + $0x160] sm:$0xf]
      %v338 = vld [vmem:[%s229 + $0x164] sm:$0xf]
      %v339 = vld [vmem:[%s229 + $0x168] sm:$0xf]
      %v340 = vld [vmem:[%s229 + $0x16c] sm:$0xf]
      %v341 = vld [vmem:[%s229 + $0x170] sm:$0xf]
      %v342 = vld [vmem:[%s229 + $0x174] sm:$0xf]
      %v343 = vld [vmem:[%s229 + $0x178] sm:$0xf]
      %v344 = vld [vmem:[%s229 + $0x17c] sm:$0xf]
      %v345 = vld [vmem:[%s229 + $0x180] sm:$0xf]
      %v346 = vld [vmem:[%s229 + $0x184] sm:$0xf]
      %v347 = vld [vmem:[%s229 + $0x188] sm:$0xf]
      %v348 = vld [vmem:[%s229 + $0x18c] sm:$0xf]
      %v349 = vld [vmem:[%s229 + $0x190] sm:$0xf]
      %v350 = vld [vmem:[%s229 + $0x194] sm:$0xf]
      %v351 = vld [vmem:[%s229 + $0x198] sm:$0xf]
      %v352 = vld [vmem:[%s229 + $0x19c] sm:$0xf]
      %v353 = vld [vmem:[%s229 + $0x1a0] sm:$0xf]
      %v354 = vld [vmem:[%s229 + $0x1a4] sm:$0xf]
      %v355 = vld [vmem:[%s229 + $0x1a8] sm:$0xf]
      %v356 = vld [vmem:[%s229 + $0x1ac] sm:$0xf]
      %v357 = vld [vmem:[%s229 + $0x1b0] sm:$0xf]
      %v358 = vld [vmem:[%s229 + $0x1b4] sm:$0xf]
      %v359 = vld [vmem:[%s229 + $0x1b8] sm:$0xf]
      %v360 = vld [vmem:[%s229 + $0x1bc] sm:$0xf]
      %v361 = vld [vmem:[%s229 + $0x1c0] sm:$0xf]
      %v362 = vld [vmem:[%s229 + $0x1c4] sm:$0xf]
      %v363 = vld [vmem:[%s229 + $0x1c8] sm:$0xf]
      %v364 = vld [vmem:[%s229 + $0x1cc] sm:$0xf]
      %v365 = vld [vmem:[%s229 + $0x1d0] sm:$0xf]
      %v366 = vld [vmem:[%s229 + $0x1d4] sm:$0xf]
      %v367 = vld [vmem:[%s229 + $0x1d8] sm:$0xf]
      %v368 = vld [vmem:[%s229 + $0x1dc] sm:$0xf]
      %v369 = vld [vmem:[%s229 + $0x1e0] sm:$0xf]
      %v370 = vld [vmem:[%s229 + $0x1e4] sm:$0xf]
      %v371 = vld [vmem:[%s229 + $0x1e8] sm:$0xf]
      %v372 = vld [vmem:[%s229 + $0x1ec] sm:$0xf]
      %v373 = vld [vmem:[%s229 + $0x1f0] sm:$0xf]
      %v374 = vld [vmem:[%s229 + $0x1f4] sm:$0xf]
      %v375 = vld [vmem:[%s229 + $0x1f8] sm:$0xf]
      %v376 = vld [vmem:[%s229 + $0x1fc] sm:$0xf]
      %v377 = vld [vmem:[%s229 + $0x200] sm:$0xf]
      %v378 = vld [vmem:[%s229 + $0x204] sm:$0xf]
      %v379 = vld [vmem:[%s229 + $0x208] sm:$0xf]
      %v380 = vld [vmem:[%s229 + $0x20c] sm:$0xf]
      %v381 = vld [vmem:[%s229 + $0x210] sm:$0xf]
      %v382 = vld [vmem:[%s229 + $0x214] sm:$0xf]
      %v383 = vld [vmem:[%s229 + $0x218] sm:$0xf]
      %v384 = vld [vmem:[%s229 + $0x21c] sm:$0xf]
      %v385 = vld [vmem:[%s229 + $0x220] sm:$0xf]
      %v386 = vld [vmem:[%s229 + $0x224] sm:$0xf]
      %v387 = vld [vmem:[%s229 + $0x228] sm:$0xf]
      %v388 = vld [vmem:[%s229 + $0x22c] sm:$0xf]
      %v389 = vld [vmem:[%s229 + $0x230] sm:$0xf]
      %v390 = vld [vmem:[%s229 + $0x234] sm:$0xf]
      %v391 = vld [vmem:[%s229 + $0x238] sm:$0xf]
      %v392 = vld [vmem:[%s229 + $0x23c] sm:$0xf]
      %v393 = vld [vmem:[%s229 + $0x240] sm:$0xf]
      %v394 = vld [vmem:[%s229 + $0x244] sm:$0xf]
      %v395 = vld [vmem:[%s229 + $0x248] sm:$0xf]
      %v396 = vld [vmem:[%s229 + $0x24c] sm:$0xf]
      %v397 = vld [vmem:[%s229 + $0x250] sm:$0xf]
      %v398 = vld [vmem:[%s229 + $0x254] sm:$0xf]
      %v399 = vld [vmem:[%s229 + $0x258] sm:$0xf]
      %v400 = vld [vmem:[%s229 + $0x25c] sm:$0xf]
      %v401 = vld [vmem:[%s229 + $0x260] sm:$0xf]
      %v402 = vld [vmem:[%s229 + $0x264] sm:$0xf]
      %v403 = vld [vmem:[%s229 + $0x268] sm:$0xf]
      %v404 = vld [vmem:[%s229 + $0x26c] sm:$0xf]
      %v405 = vld [vmem:[%s229 + $0x270] sm:$0xf]
      %v406 = vld [vmem:[%s229 + $0x274] sm:$0xf]
      %v407 = vld [vmem:[%s229 + $0x278] sm:$0xf]
      %v408 = vld [vmem:[%s229 + $0x27c] sm:$0xf]
      %v409 = vld [vmem:[%s229 + $0x280] sm:$0xf]
      %v410 = vld [vmem:[%s229 + $0x284] sm:$0xf]
      %v411 = vld [vmem:[%s229 + $0x288] sm:$0xf]
      %v412 = vld [vmem:[%s229 + $0x28c] sm:$0xf]
      %v413 = vld [vmem:[%s229 + $0x290] sm:$0xf]
      %v414 = vld [vmem:[%s229 + $0x294] sm:$0xf]
      %v415 = vld [vmem:[%s229 + $0x298] sm:$0xf]
      %v416 = vld [vmem:[%s229 + $0x29c] sm:$0xf]
      %v417 = vld [vmem:[%s229 + $0x2a0] sm:$0xf]
      %v418 = vld [vmem:[%s229 + $0x2a4] sm:$0xf]
      %v419 = vld [vmem:[%s229 + $0x2a8] sm:$0xf]
      %v420 = vld [vmem:[%s229 + $0x2ac] sm:$0xf]
      %v421 = vld [vmem:[%s229 + $0x2b0] sm:$0xf]
      %v422 = vld [vmem:[%s229 + $0x2b4] sm:$0xf]
      %v423 = vld [vmem:[%s229 + $0x2b8] sm:$0xf]
      %v424 = vld [vmem:[%s229 + $0x2bc] sm:$0xf]
      %v425 = vld [vmem:[%s229 + $0x2c0] sm:$0xf]
      %v426 = vld [vmem:[%s229 + $0x2c4] sm:$0xf]
      %v427 = vld [vmem:[%s229 + $0x2c8] sm:$0xf]
      %v428 = vld [vmem:[%s229 + $0x2cc] sm:$0xf]
      %v429 = vld [vmem:[%s229 + $0x2d0] sm:$0xf]
      %v430 = vld [vmem:[%s229 + $0x2d4] sm:$0xf]
      %v431 = vld [vmem:[%s229 + $0x2d8] sm:$0xf]
      %v432 = vld [vmem:[%s229 + $0x2dc] sm:$0xf]
      %v433 = vld [vmem:[%s229 + $0x2e0] sm:$0xf]
      %v434 = vld [vmem:[%s229 + $0x2e4] sm:$0xf]
      %v435 = vld [vmem:[%s229 + $0x2e8] sm:$0xf]
      %v436 = vld [vmem:[%s229 + $0x2ec] sm:$0xf]
      %v437 = vld [vmem:[%s229 + $0x2f0] sm:$0xf]
      %v438 = vld [vmem:[%s229 + $0x2f4] sm:$0xf]
      %v439 = vld [vmem:[%s229 + $0x2f8] sm:$0xf]
      %v440 = vld [vmem:[%s229 + $0x2fc] sm:$0xf]
      %v441 = vld [vmem:[%s229 + $0x300] sm:$0xf]
      %v442 = vld [vmem:[%s229 + $0x304] sm:$0xf]
      %v443 = vld [vmem:[%s229 + $0x308] sm:$0xf]
      %v444 = vld [vmem:[%s229 + $0x30c] sm:$0xf]
      %v445 = vld [vmem:[%s229 + $0x310] sm:$0xf]
      %v446 = vld [vmem:[%s229 + $0x314] sm:$0xf]
      %v447 = vld [vmem:[%s229 + $0x318] sm:$0xf]
      %v448 = vld [vmem:[%s229 + $0x31c] sm:$0xf]
      %v449 = vld [vmem:[%s229 + $0x320] sm:$0xf]
      %v450 = vld [vmem:[%s229 + $0x324] sm:$0xf]
      %v451 = vld [vmem:[%s229 + $0x328] sm:$0xf]
      %v452 = vld [vmem:[%s229 + $0x32c] sm:$0xf]
      %v453 = vld [vmem:[%s229 + $0x330] sm:$0xf]
      %v454 = vld [vmem:[%s229 + $0x334] sm:$0xf]
      %v455 = vld [vmem:[%s229 + $0x338] sm:$0xf]
      %v456 = vld [vmem:[%s229 + $0x33c] sm:$0xf]
      %v457 = vld [vmem:[%s229 + $0x340] sm:$0xf]
      %v458 = vld [vmem:[%s229 + $0x344] sm:$0xf]
      %v459 = vld [vmem:[%s229 + $0x348] sm:$0xf]
      %v460 = vld [vmem:[%s229 + $0x34c] sm:$0xf]
      %v461 = vld [vmem:[%s229 + $0x350] sm:$0xf]
      %v462 = vld [vmem:[%s229 + $0x354] sm:$0xf]
      %v463 = vld [vmem:[%s229 + $0x358] sm:$0xf]
      %v464 = vld [vmem:[%s229 + $0x35c] sm:$0xf]
      %v465 = vld [vmem:[%s229 + $0x360] sm:$0xf]
      %v466 = vld [vmem:[%s229 + $0x364] sm:$0xf]
      %v467 = vld [vmem:[%s229 + $0x368] sm:$0xf]
      %v468 = vld [vmem:[%s229 + $0x36c] sm:$0xf]
      %v469 = vld [vmem:[%s229 + $0x370] sm:$0xf]
      %v470 = vld [vmem:[%s229 + $0x374] sm:$0xf]
      %v471 = vld [vmem:[%s229 + $0x378] sm:$0xf]
      %v472 = vld [vmem:[%s229 + $0x37c] sm:$0xf]
      %v473 = vld [vmem:[%s229 + $0x380] sm:$0xf]
      %v474 = vld [vmem:[%s229 + $0x384] sm:$0xf]
      %v475 = vld [vmem:[%s229 + $0x388] sm:$0xf]
      %v476 = vld [vmem:[%s229 + $0x38c] sm:$0xf]
      %v477 = vld [vmem:[%s229 + $0x390] sm:$0xf]
      %v478 = vld [vmem:[%s229 + $0x394] sm:$0xf]
      %v479 = vld [vmem:[%s229 + $0x398] sm:$0xf]
      %v480 = vld [vmem:[%s229 + $0x39c] sm:$0xf]
      %v481 = vld [vmem:[%s229 + $0x3a0] sm:$0xf]
      %v482 = vld [vmem:[%s229 + $0x3a4] sm:$0xf]
      %v483 = vld [vmem:[%s229 + $0x3a8] sm:$0xf]
      %v484 = vld [vmem:[%s229 + $0x3ac] sm:$0xf]
      %v485 = vld [vmem:[%s229 + $0x3b0] sm:$0xf]
      %v486 = vld [vmem:[%s229 + $0x3b4] sm:$0xf]
      %v487 = vld [vmem:[%s229 + $0x3b8] sm:$0xf]
      %v488 = vld [vmem:[%s229 + $0x3bc] sm:$0xf]
      %v489 = vld [vmem:[%s229 + $0x3c0] sm:$0xf]
      %v490 = vld [vmem:[%s229 + $0x3c4] sm:$0xf]
      %v491 = vld [vmem:[%s229 + $0x3c8] sm:$0xf]
      %v492 = vld [vmem:[%s229 + $0x3cc] sm:$0xf]
      %v493 = vld [vmem:[%s229 + $0x3d0] sm:$0xf]
      %v494 = vld [vmem:[%s229 + $0x3d4] sm:$0xf]
      %v495 = vld [vmem:[%s229 + $0x3d8] sm:$0xf]
      %v496 = vld [vmem:[%s229 + $0x3dc] sm:$0xf]
      %v497 = vld [vmem:[%s229 + $0x3e0] sm:$0xf]
      %v498 = vld [vmem:[%s229 + $0x3e4] sm:$0xf]
      %v499 = vld [vmem:[%s229 + $0x3e8] sm:$0xf]
      %v500 = vld [vmem:[%s229 + $0x3ec] sm:$0xf]
      %v501 = vld [vmem:[%s229 + $0x3f0] sm:$0xf]
      %v502 = vld [vmem:[%s229 + $0x3f4] sm:$0xf]
      %v503 = vld [vmem:[%s229 + $0x3f8] sm:$0xf]
      %v504 = vld [vmem:[%s229 + $0x3fc] sm:$0xf]
      %v505 = vld [vmem:[%s235] sm:$0xf]
      %v506 = vld [vmem:[%s235 + $0x4] sm:$0xf]
      %v507 = vld [vmem:[%s235 + $0x8] sm:$0xf]
      %v508 = vld [vmem:[%s235 + $0xc] sm:$0xf]
      %v765 = vunpack.c.l.b16 %v249
      %v766 = vunpack.c.l.b16 %v250
      %v767 = vunpack.c.l.b16 %v251
      %v768 = vunpack.c.l.b16 %v252
      %v769 = vunpack.c.l.b16 %v253
      %v770 = vunpack.c.l.b16 %v254
      %v771 = vunpack.c.l.b16 %v255
      %v772 = vunpack.c.l.b16 %v256
      %v773 = vunpack.c.l.b16 %v257
      %v774 = vunpack.c.l.b16 %v258
      %v775 = vunpack.c.l.b16 %v259
      %v776 = vunpack.c.l.b16 %v260
      %v777 = vunpack.c.l.b16 %v261
      %v778 = vunpack.c.l.b16 %v262
      %v779 = vunpack.c.l.b16 %v263
      %v780 = vunpack.c.l.b16 %v264
      %v781 = vunpack.c.l.b16 %v265
      %v782 = vunpack.c.l.b16 %v266
      %v783 = vunpack.c.l.b16 %v267
      %v784 = vunpack.c.l.b16 %v268
      %v785 = vunpack.c.l.b16 %v269
      %v786 = vunpack.c.l.b16 %v270
      %v787 = vunpack.c.l.b16 %v271
      %v788 = vunpack.c.l.b16 %v272
      %v789 = vunpack.c.l.b16 %v273
      %v790 = vunpack.c.l.b16 %v274
      %v791 = vunpack.c.l.b16 %v275
      %v792 = vunpack.c.l.b16 %v276
      %v793 = vunpack.c.l.b16 %v277
      %v794 = vunpack.c.l.b16 %v278
      %v795 = vunpack.c.l.b16 %v279
      %v796 = vunpack.c.l.b16 %v280
      %v797 = vunpack.c.l.b16 %v281
      %v798 = vunpack.c.l.b16 %v282
      %v799 = vunpack.c.l.b16 %v283
      %v800 = vunpack.c.l.b16 %v284
      %v801 = vunpack.c.l.b16 %v285
      %v802 = vunpack.c.l.b16 %v286
      %v803 = vunpack.c.l.b16 %v287
      %v804 = vunpack.c.l.b16 %v288
      %v805 = vunpack.c.l.b16 %v289
      %v806 = vunpack.c.l.b16 %v290
      %v807 = vunpack.c.l.b16 %v291
      %v808 = vunpack.c.l.b16 %v292
      %v809 = vunpack.c.l.b16 %v293
      %v810 = vunpack.c.l.b16 %v294
      %v811 = vunpack.c.l.b16 %v295
      %v812 = vunpack.c.l.b16 %v296
      %v813 = vunpack.c.l.b16 %v297
      %v814 = vunpack.c.l.b16 %v298
      %v815 = vunpack.c.l.b16 %v299
      %v816 = vunpack.c.l.b16 %v300
      %v817 = vunpack.c.l.b16 %v301
      %v818 = vunpack.c.l.b16 %v302
      %v819 = vunpack.c.l.b16 %v303
      %v820 = vunpack.c.l.b16 %v304
      %v821 = vunpack.c.l.b16 %v305
      %v822 = vunpack.c.l.b16 %v306
      %v823 = vunpack.c.l.b16 %v307
      %v824 = vunpack.c.l.b16 %v308
      %v825 = vunpack.c.l.b16 %v309
      %v826 = vunpack.c.l.b16 %v310
      %v827 = vunpack.c.l.b16 %v311
      %v828 = vunpack.c.l.b16 %v312
      %v829 = vunpack.c.l.b16 %v313
      %v830 = vunpack.c.l.b16 %v314
      %v831 = vunpack.c.l.b16 %v315
      %v832 = vunpack.c.l.b16 %v316
      %v833 = vunpack.c.l.b16 %v317
      %v834 = vunpack.c.l.b16 %v318
      %v835 = vunpack.c.l.b16 %v319
      %v836 = vunpack.c.l.b16 %v320
      %v837 = vunpack.c.l.b16 %v321
      %v838 = vunpack.c.l.b16 %v322
      %v839 = vunpack.c.l.b16 %v323
      %v840 = vunpack.c.l.b16 %v324
      %v841 = vunpack.c.l.b16 %v325
      %v842 = vunpack.c.l.b16 %v326
      %v843 = vunpack.c.l.b16 %v327
      %v844 = vunpack.c.l.b16 %v328
      %v845 = vunpack.c.l.b16 %v329
      %v846 = vunpack.c.l.b16 %v330
      %v847 = vunpack.c.l.b16 %v331
      %v848 = vunpack.c.l.b16 %v332
      %v849 = vunpack.c.l.b16 %v333
      %v850 = vunpack.c.l.b16 %v334
      %v851 = vunpack.c.l.b16 %v335
      %v852 = vunpack.c.l.b16 %v336
      %v853 = vunpack.c.l.b16 %v337
      %v854 = vunpack.c.l.b16 %v338
      %v855 = vunpack.c.l.b16 %v339
      %v856 = vunpack.c.l.b16 %v340
      %v857 = vunpack.c.l.b16 %v341
      %v858 = vunpack.c.l.b16 %v342
      %v859 = vunpack.c.l.b16 %v343
      %v860 = vunpack.c.l.b16 %v344
      %v861 = vunpack.c.l.b16 %v345
      %v862 = vunpack.c.l.b16 %v346
      %v863 = vunpack.c.l.b16 %v347
      %v864 = vunpack.c.l.b16 %v348
      %v865 = vunpack.c.l.b16 %v349
      %v866 = vunpack.c.l.b16 %v350
      %v867 = vunpack.c.l.b16 %v351
      %v868 = vunpack.c.l.b16 %v352
      %v869 = vunpack.c.l.b16 %v353
      %v870 = vunpack.c.l.b16 %v354
      %v871 = vunpack.c.l.b16 %v355
      %v872 = vunpack.c.l.b16 %v356
      %v873 = vunpack.c.l.b16 %v357
      %v874 = vunpack.c.l.b16 %v358
      %v875 = vunpack.c.l.b16 %v359
      %v876 = vunpack.c.l.b16 %v360
      %v877 = vunpack.c.l.b16 %v361
      %v878 = vunpack.c.l.b16 %v362
      %v879 = vunpack.c.l.b16 %v363
      %v880 = vunpack.c.l.b16 %v364
      %v881 = vunpack.c.l.b16 %v365
      %v882 = vunpack.c.l.b16 %v366
      %v883 = vunpack.c.l.b16 %v367
      %v884 = vunpack.c.l.b16 %v368
      %v885 = vunpack.c.l.b16 %v369
      %v886 = vunpack.c.l.b16 %v370
      %v887 = vunpack.c.l.b16 %v371
      %v888 = vunpack.c.l.b16 %v372
      %v889 = vunpack.c.l.b16 %v373
      %v890 = vunpack.c.l.b16 %v374
      %v891 = vunpack.c.l.b16 %v375
      %v892 = vunpack.c.l.b16 %v376
      %v893 = vunpack.c.l.b16 %v377
      %v894 = vunpack.c.l.b16 %v378
      %v895 = vunpack.c.l.b16 %v379
      %v896 = vunpack.c.l.b16 %v380
      %v897 = vunpack.c.l.b16 %v381
      %v898 = vunpack.c.l.b16 %v382
      %v899 = vunpack.c.l.b16 %v383
      %v900 = vunpack.c.l.b16 %v384
      %v901 = vunpack.c.l.b16 %v385
      %v902 = vunpack.c.l.b16 %v386
      %v903 = vunpack.c.l.b16 %v387
      %v904 = vunpack.c.l.b16 %v388
      %v905 = vunpack.c.l.b16 %v389
      %v906 = vunpack.c.l.b16 %v390
      %v907 = vunpack.c.l.b16 %v391
      %v908 = vunpack.c.l.b16 %v392
      %v909 = vunpack.c.l.b16 %v393
      %v910 = vunpack.c.l.b16 %v394
      %v911 = vunpack.c.l.b16 %v395
      %v912 = vunpack.c.l.b16 %v396
      %v913 = vunpack.c.l.b16 %v397
      %v914 = vunpack.c.l.b16 %v398
      %v915 = vunpack.c.l.b16 %v399
      %v916 = vunpack.c.l.b16 %v400
      %v917 = vunpack.c.l.b16 %v401
      %v918 = vunpack.c.l.b16 %v402
      %v919 = vunpack.c.l.b16 %v403
      %v920 = vunpack.c.l.b16 %v404
      %v921 = vunpack.c.l.b16 %v405
      %v922 = vunpack.c.l.b16 %v406
      %v923 = vunpack.c.l.b16 %v407
      %v924 = vunpack.c.l.b16 %v408
      %v925 = vunpack.c.l.b16 %v409
      %v926 = vunpack.c.l.b16 %v410
      %v927 = vunpack.c.l.b16 %v411
      %v928 = vunpack.c.l.b16 %v412
      %v929 = vunpack.c.l.b16 %v413
      %v930 = vunpack.c.l.b16 %v414
      %v931 = vunpack.c.l.b16 %v415
      %v932 = vunpack.c.l.b16 %v416
      %v933 = vunpack.c.l.b16 %v417
      %v934 = vunpack.c.l.b16 %v418
      %v935 = vunpack.c.l.b16 %v419
      %v936 = vunpack.c.l.b16 %v420
      %v937 = vunpack.c.l.b16 %v421
      %v938 = vunpack.c.l.b16 %v422
      %v939 = vunpack.c.l.b16 %v423
      %v940 = vunpack.c.l.b16 %v424
      %v941 = vunpack.c.l.b16 %v425
      %v942 = vunpack.c.l.b16 %v426
      %v943 = vunpack.c.l.b16 %v427
      %v944 = vunpack.c.l.b16 %v428
      %v945 = vunpack.c.l.b16 %v429
      %v946 = vunpack.c.l.b16 %v430
      %v947 = vunpack.c.l.b16 %v431
      %v948 = vunpack.c.l.b16 %v432
      %v949 = vunpack.c.l.b16 %v433
      %v950 = vunpack.c.l.b16 %v434
      %v951 = vunpack.c.l.b16 %v435
      %v952 = vunpack.c.l.b16 %v436
      %v953 = vunpack.c.l.b16 %v437
      %v954 = vunpack.c.l.b16 %v438
      %v955 = vunpack.c.l.b16 %v439
      %v956 = vunpack.c.l.b16 %v440
      %v957 = vunpack.c.l.b16 %v441
      %v958 = vunpack.c.l.b16 %v442
      %v959 = vunpack.c.l.b16 %v443
      %v960 = vunpack.c.l.b16 %v444
      %v961 = vunpack.c.l.b16 %v445
      %v962 = vunpack.c.l.b16 %v446
      %v963 = vunpack.c.l.b16 %v447
      %v964 = vunpack.c.l.b16 %v448
      %v965 = vunpack.c.l.b16 %v449
      %v966 = vunpack.c.l.b16 %v450
      %v967 = vunpack.c.l.b16 %v451
      %v968 = vunpack.c.l.b16 %v452
      %v969 = vunpack.c.l.b16 %v453
      %v970 = vunpack.c.l.b16 %v454
      %v971 = vunpack.c.l.b16 %v455
      %v972 = vunpack.c.l.b16 %v456
      %v973 = vunpack.c.l.b16 %v457
      %v974 = vunpack.c.l.b16 %v458
      %v975 = vunpack.c.l.b16 %v459
      %v976 = vunpack.c.l.b16 %v460
      %v977 = vunpack.c.l.b16 %v461
      %v978 = vunpack.c.l.b16 %v462
      %v979 = vunpack.c.l.b16 %v463
      %v980 = vunpack.c.l.b16 %v464
      %v981 = vunpack.c.l.b16 %v465
      %v982 = vunpack.c.l.b16 %v466
      %v983 = vunpack.c.l.b16 %v467
      %v984 = vunpack.c.l.b16 %v468
      %v985 = vunpack.c.l.b16 %v469
      %v986 = vunpack.c.l.b16 %v470
      %v987 = vunpack.c.l.b16 %v471
      %v988 = vunpack.c.l.b16 %v472
      %v989 = vunpack.c.l.b16 %v473
      %v990 = vunpack.c.l.b16 %v474
      %v991 = vunpack.c.l.b16 %v475
      %v992 = vunpack.c.l.b16 %v476
      %v993 = vunpack.c.l.b16 %v477
      %v994 = vunpack.c.l.b16 %v478
      %v995 = vunpack.c.l.b16 %v479
      %v996 = vunpack.c.l.b16 %v480
      %v997 = vunpack.c.l.b16 %v481
      %v998 = vunpack.c.l.b16 %v482
      %v999 = vunpack.c.l.b16 %v483
      %v1000 = vunpack.c.l.b16 %v484
      %v1001 = vunpack.c.l.b16 %v485
      %v1002 = vunpack.c.l.b16 %v486
      %v1003 = vunpack.c.l.b16 %v487
      %v1004 = vunpack.c.l.b16 %v488
      %v1005 = vunpack.c.l.b16 %v489
      %v1006 = vunpack.c.l.b16 %v490
      %v1007 = vunpack.c.l.b16 %v491
      %v1008 = vunpack.c.l.b16 %v492
      %v1009 = vunpack.c.l.b16 %v493
      %v1010 = vunpack.c.l.b16 %v494
      %v1011 = vunpack.c.l.b16 %v495
      %v1012 = vunpack.c.l.b16 %v496
      %v1013 = vunpack.c.l.b16 %v497
      %v1014 = vunpack.c.l.b16 %v498
      %v1015 = vunpack.c.l.b16 %v499
      %v1016 = vunpack.c.l.b16 %v500
      %v1017 = vunpack.c.l.b16 %v501
      %v1018 = vunpack.c.l.b16 %v502
      %v1019 = vunpack.c.l.b16 %v503
      %v1020 = vunpack.c.l.b16 %v504
      %v1021 = vpack.c.b16 %v766, %v765
      %v1022 = vpack.c.b16 %v768, %v767
      %v1023 = vpack.c.b16 %v770, %v769
      %v1024 = vpack.c.b16 %v772, %v771
      %v1025 = vpack.c.b16 %v774, %v773
      %v1026 = vpack.c.b16 %v776, %v775
      %v1027 = vpack.c.b16 %v778, %v777
      %v1028 = vpack.c.b16 %v780, %v779
      %v1029 = vpack.c.b16 %v782, %v781
      %v1030 = vpack.c.b16 %v784, %v783
      %v1031 = vpack.c.b16 %v786, %v785
      %v1032 = vpack.c.b16 %v788, %v787
      %v1033 = vpack.c.b16 %v790, %v789
      %v1034 = vpack.c.b16 %v792, %v791
      %v1035 = vpack.c.b16 %v794, %v793
      %v1036 = vpack.c.b16 %v796, %v795
      %v1037 = vpack.c.b16 %v798, %v797
      %v1038 = vpack.c.b16 %v800, %v799
      %v1039 = vpack.c.b16 %v802, %v801
      %v1040 = vpack.c.b16 %v804, %v803
      %v1041 = vpack.c.b16 %v806, %v805
      %v1042 = vpack.c.b16 %v808, %v807
      %v1043 = vpack.c.b16 %v810, %v809
      %v1044 = vpack.c.b16 %v812, %v811
      %v1045 = vpack.c.b16 %v814, %v813
      %v1046 = vpack.c.b16 %v816, %v815
      %v1047 = vpack.c.b16 %v818, %v817
      %v1048 = vpack.c.b16 %v820, %v819
      %v1049 = vpack.c.b16 %v822, %v821
      %v1050 = vpack.c.b16 %v824, %v823
      %v1051 = vpack.c.b16 %v826, %v825
      %v1052 = vpack.c.b16 %v828, %v827
      %v1053 = vpack.c.b16 %v830, %v829
      %v1054 = vpack.c.b16 %v832, %v831
      %v1055 = vpack.c.b16 %v834, %v833
      %v1056 = vpack.c.b16 %v836, %v835
      %v1057 = vpack.c.b16 %v838, %v837
      %v1058 = vpack.c.b16 %v840, %v839
      %v1059 = vpack.c.b16 %v842, %v841
      %v1060 = vpack.c.b16 %v844, %v843
      %v1061 = vpack.c.b16 %v846, %v845
      %v1062 = vpack.c.b16 %v848, %v847
      %v1063 = vpack.c.b16 %v850, %v849
      %v1064 = vpack.c.b16 %v852, %v851
      %v1065 = vpack.c.b16 %v854, %v853
      %v1066 = vpack.c.b16 %v856, %v855
      %v1067 = vpack.c.b16 %v858, %v857
      %v1068 = vpack.c.b16 %v860, %v859
      %v1069 = vpack.c.b16 %v862, %v861
      %v1070 = vpack.c.b16 %v864, %v863
      %v1071 = vpack.c.b16 %v866, %v865
      %v1072 = vpack.c.b16 %v868, %v867
      %v1073 = vpack.c.b16 %v870, %v869
      %v1074 = vpack.c.b16 %v872, %v871
      %v1075 = vpack.c.b16 %v874, %v873
      %v1076 = vpack.c.b16 %v876, %v875
      %v1077 = vpack.c.b16 %v878, %v877
      %v1078 = vpack.c.b16 %v880, %v879
      %v1079 = vpack.c.b16 %v882, %v881
      %v1080 = vpack.c.b16 %v884, %v883
      %v1081 = vpack.c.b16 %v886, %v885
      %v1082 = vpack.c.b16 %v888, %v887
      %v1083 = vpack.c.b16 %v890, %v889
      %v1084 = vpack.c.b16 %v892, %v891
      %v1085 = vpack.c.b16 %v894, %v893
      %v1086 = vpack.c.b16 %v896, %v895
      %v1087 = vpack.c.b16 %v898, %v897
      %v1088 = vpack.c.b16 %v900, %v899
      %v1089 = vpack.c.b16 %v902, %v901
      %v1090 = vpack.c.b16 %v904, %v903
      %v1091 = vpack.c.b16 %v906, %v905
      %v1092 = vpack.c.b16 %v908, %v907
      %v1093 = vpack.c.b16 %v910, %v909
      %v1094 = vpack.c.b16 %v912, %v911
      %v1095 = vpack.c.b16 %v914, %v913
      %v1096 = vpack.c.b16 %v916, %v915
      %v1097 = vpack.c.b16 %v918, %v917
      %v1098 = vpack.c.b16 %v920, %v919
      %v1099 = vpack.c.b16 %v922, %v921
      %v1100 = vpack.c.b16 %v924, %v923
      %v1101 = vpack.c.b16 %v926, %v925
      %v1102 = vpack.c.b16 %v928, %v927
      %v1103 = vpack.c.b16 %v930, %v929
      %v1104 = vpack.c.b16 %v932, %v931
      %v1105 = vpack.c.b16 %v934, %v933
      %v1106 = vpack.c.b16 %v936, %v935
      %v1107 = vpack.c.b16 %v938, %v937
      %v1108 = vpack.c.b16 %v940, %v939
      %v1109 = vpack.c.b16 %v942, %v941
      %v1110 = vpack.c.b16 %v944, %v943
      %v1111 = vpack.c.b16 %v946, %v945
      %v1112 = vpack.c.b16 %v948, %v947
      %v1113 = vpack.c.b16 %v950, %v949
      %v1114 = vpack.c.b16 %v952, %v951
      %v1115 = vpack.c.b16 %v954, %v953
      %v1116 = vpack.c.b16 %v956, %v955
      %v1117 = vpack.c.b16 %v958, %v957
      %v1118 = vpack.c.b16 %v960, %v959
      %v1119 = vpack.c.b16 %v962, %v961
      %v1120 = vpack.c.b16 %v964, %v963
      %v1121 = vpack.c.b16 %v966, %v965
      %v1122 = vpack.c.b16 %v968, %v967
      %v1123 = vpack.c.b16 %v970, %v969
      %v1124 = vpack.c.b16 %v972, %v971
      %v1125 = vpack.c.b16 %v974, %v973
      %v1126 = vpack.c.b16 %v976, %v975
      %v1127 = vpack.c.b16 %v978, %v977
      %v1128 = vpack.c.b16 %v980, %v979
      %v1129 = vpack.c.b16 %v982, %v981
      %v1130 = vpack.c.b16 %v984, %v983
      %v1131 = vpack.c.b16 %v986, %v985
      %v1132 = vpack.c.b16 %v988, %v987
      %v1133 = vpack.c.b16 %v990, %v989
      %v1134 = vpack.c.b16 %v992, %v991
      %v1135 = vpack.c.b16 %v994, %v993
      %v1136 = vpack.c.b16 %v996, %v995
      %v1137 = vpack.c.b16 %v998, %v997
      %v1138 = vpack.c.b16 %v1000, %v999
      %v1139 = vpack.c.b16 %v1002, %v1001
      %v1140 = vpack.c.b16 %v1004, %v1003
      %v1141 = vpack.c.b16 %v1006, %v1005
      %v1142 = vpack.c.b16 %v1008, %v1007
      %v1143 = vpack.c.b16 %v1010, %v1009
      %v1144 = vpack.c.b16 %v1012, %v1011
      %v1145 = vpack.c.b16 %v1014, %v1013
      %v1146 = vpack.c.b16 %v1016, %v1015
      %v1147 = vpack.c.b16 %v1018, %v1017
      %v1148 = vpack.c.b16 %v1020, %v1019
      %v1153 = vunpack.c.l.b16 %v505
      %v1154 = vunpack.c.l.b16 %v506
      %v1155 = vunpack.c.l.b16 %v507
      %v1156 = vunpack.c.l.b16 %v508
      %v1157 = vpack.c.b16 %v1154, %v1153
      %v1158 = vpack.c.b16 %v1156, %v1155
      %vm1161 = vcmask 261120
      %v1163 = vsel %vm1161, %v1021, 0
      %v1166 = vsel %vm1161, %v1022, 0
      %v1169 = vsel %vm1161, %v1023, 0
      %v1172 = vsel %vm1161, %v1024, 0
      %v1175 = vsel %vm1161, %v1025, 0
      %v1178 = vsel %vm1161, %v1026, 0
      %v1181 = vsel %vm1161, %v1027, 0
      %v1184 = vsel %vm1161, %v1028, 0
      %v1187 = vsel %vm1161, %v1029, 0
      %v1190 = vsel %vm1161, %v1030, 0
      %v1193 = vsel %vm1161, %v1031, 0
      %v1196 = vsel %vm1161, %v1032, 0
      %v1199 = vsel %vm1161, %v1033, 0
      %v1202 = vsel %vm1161, %v1034, 0
      %v1205 = vsel %vm1161, %v1035, 0
      %v1208 = vsel %vm1161, %v1036, 0
      %v1211 = vsel %vm1161, %v1037, 0
      %v1214 = vsel %vm1161, %v1038, 0
      %v1217 = vsel %vm1161, %v1039, 0
      %v1220 = vsel %vm1161, %v1040, 0
      %v1223 = vsel %vm1161, %v1041, 0
      %v1226 = vsel %vm1161, %v1042, 0
      %v1229 = vsel %vm1161, %v1043, 0
      %v1232 = vsel %vm1161, %v1044, 0
      %v1235 = vsel %vm1161, %v1045, 0
      %v1238 = vsel %vm1161, %v1046, 0
      %v1241 = vsel %vm1161, %v1047, 0
      %v1244 = vsel %vm1161, %v1048, 0
      %v1247 = vsel %vm1161, %v1049, 0
      %v1250 = vsel %vm1161, %v1050, 0
      %v1253 = vsel %vm1161, %v1051, 0
      %v1256 = vsel %vm1161, %v1052, 0
      %v1259 = vsel %vm1161, %v1053, 0
      %v1262 = vsel %vm1161, %v1054, 0
      %v1265 = vsel %vm1161, %v1055, 0
      %v1268 = vsel %vm1161, %v1056, 0
      %v1271 = vsel %vm1161, %v1057, 0
      %v1274 = vsel %vm1161, %v1058, 0
      %v1277 = vsel %vm1161, %v1059, 0
      %v1280 = vsel %vm1161, %v1060, 0
      %v1283 = vsel %vm1161, %v1061, 0
      %v1286 = vsel %vm1161, %v1062, 0
      %v1289 = vsel %vm1161, %v1063, 0
      %v1292 = vsel %vm1161, %v1064, 0
      %v1295 = vsel %vm1161, %v1065, 0
      %v1298 = vsel %vm1161, %v1066, 0
      %v1301 = vsel %vm1161, %v1067, 0
      %v1304 = vsel %vm1161, %v1068, 0
      %v1307 = vsel %vm1161, %v1069, 0
      %v1310 = vsel %vm1161, %v1070, 0
      %v1313 = vsel %vm1161, %v1071, 0
      %v1316 = vsel %vm1161, %v1072, 0
      %v1319 = vsel %vm1161, %v1073, 0
      %v1322 = vsel %vm1161, %v1074, 0
      %v1325 = vsel %vm1161, %v1075, 0
      %v1328 = vsel %vm1161, %v1076, 0
      %v1331 = vsel %vm1161, %v1077, 0
      %v1334 = vsel %vm1161, %v1078, 0
      %v1337 = vsel %vm1161, %v1079, 0
      %v1340 = vsel %vm1161, %v1080, 0
      %v1343 = vsel %vm1161, %v1081, 0
      %v1346 = vsel %vm1161, %v1082, 0
      %v1349 = vsel %vm1161, %v1083, 0
      %v1352 = vsel %vm1161, %v1084, 0
      %v1355 = vsel %vm1161, %v1085, 0
      %v1358 = vsel %vm1161, %v1086, 0
      %v1361 = vsel %vm1161, %v1087, 0
      %v1364 = vsel %vm1161, %v1088, 0
      %v1367 = vsel %vm1161, %v1089, 0
      %v1370 = vsel %vm1161, %v1090, 0
      %v1373 = vsel %vm1161, %v1091, 0
      %v1376 = vsel %vm1161, %v1092, 0
      %v1379 = vsel %vm1161, %v1093, 0
      %v1382 = vsel %vm1161, %v1094, 0
      %v1385 = vsel %vm1161, %v1095, 0
      %v1388 = vsel %vm1161, %v1096, 0
      %v1391 = vsel %vm1161, %v1097, 0
      %v1394 = vsel %vm1161, %v1098, 0
      %v1397 = vsel %vm1161, %v1099, 0
      %v1400 = vsel %vm1161, %v1100, 0
      %v1403 = vsel %vm1161, %v1101, 0
      %v1406 = vsel %vm1161, %v1102, 0
      %v1409 = vsel %vm1161, %v1103, 0
      %v1412 = vsel %vm1161, %v1104, 0
      %v1415 = vsel %vm1161, %v1105, 0
      %v1418 = vsel %vm1161, %v1106, 0
      %v1421 = vsel %vm1161, %v1107, 0
      %v1424 = vsel %vm1161, %v1108, 0
      %v1427 = vsel %vm1161, %v1109, 0
      %v1430 = vsel %vm1161, %v1110, 0
      %v1433 = vsel %vm1161, %v1111, 0
      %v1436 = vsel %vm1161, %v1112, 0
      %v1439 = vsel %vm1161, %v1113, 0
      %v1442 = vsel %vm1161, %v1114, 0
      %v1445 = vsel %vm1161, %v1115, 0
      %v1448 = vsel %vm1161, %v1116, 0
      %v1451 = vsel %vm1161, %v1117, 0
      %v1454 = vsel %vm1161, %v1118, 0
      %v1457 = vsel %vm1161, %v1119, 0
      %v1460 = vsel %vm1161, %v1120, 0
      %v1463 = vsel %vm1161, %v1121, 0
      %v1466 = vsel %vm1161, %v1122, 0
      %v1469 = vsel %vm1161, %v1123, 0
      %v1472 = vsel %vm1161, %v1124, 0
      %v1475 = vsel %vm1161, %v1125, 0
      %v1478 = vsel %vm1161, %v1126, 0
      %v1481 = vsel %vm1161, %v1127, 0
      %v1484 = vsel %vm1161, %v1128, 0
      %v1487 = vsel %vm1161, %v1129, 0
      %v1490 = vsel %vm1161, %v1130, 0
      %v1493 = vsel %vm1161, %v1131, 0
      %v1496 = vsel %vm1161, %v1132, 0
      %v1499 = vsel %vm1161, %v1133, 0
      %v1502 = vsel %vm1161, %v1134, 0
      %v1505 = vsel %vm1161, %v1135, 0
      %v1508 = vsel %vm1161, %v1136, 0
      %v1511 = vsel %vm1161, %v1137, 0
      %v1514 = vsel %vm1161, %v1138, 0
      %v1517 = vsel %vm1161, %v1139, 0
      %v1520 = vsel %vm1161, %v1140, 0
      %v1523 = vsel %vm1161, %v1141, 0
      %v1526 = vsel %vm1161, %v1142, 0
      %v1529 = vsel %vm1161, %v1143, 0
      %v1532 = vsel %vm1161, %v1144, 0
      %v1535 = vsel %vm1161, %v1145, 0
      %v1538 = vsel %vm1161, %v1146, 0
      %v1541 = vsel %vm1161, %v1147, 0
      %v1544 = vsel %vm1161, %v1148, 0
      %1546 = vmatprep.subr.bf16.mxu0 0
      %1547 = vmatpush1.bf16.msra.mxu0 0
      %1548 = vmatprep.subr.bf16.mxu0 0
      %1549 = vmatpush1.bf16.msra.mxu0 0
      %1550 = vmatprep.subr.bf16.mxu0 0
      %1551 = vmatpush1.bf16.msra.mxu0 0
      %1552 = vmatprep.subr.bf16.mxu0 0
      %1553 = vmatpush1.bf16.msra.mxu0 0
      %1554 = vmatprep.subr.bf16.mxu0 0
      %1555 = vmatpush1.bf16.msra.mxu0 0
      %1556 = vmatprep.subr.bf16.mxu0 0
      %1557 = vmatpush1.bf16.msra.mxu0 0
      %1558 = vmatprep.subr.bf16.mxu0 0
      %1559 = vmatpush1.bf16.msra.mxu0 %v1158
      %1560 = vmatprep.subr.bf16.mxu0 0
      %1561 = vmatpush1.bf16.msra.mxu0 %v1157
      %1562 = vmatprep.subr.bf16.mxu0 0
      %1563 = vmatpush2.bf16.msra.mxu0 0
      %1564 = vmatprep.subr.bf16.mxu0 0
      %1565 = vmatpush2.bf16.msra.mxu0 0
      %1566 = vmatprep.subr.bf16.mxu0 0
      %1567 = vmatpush2.bf16.msra.mxu0 0
      %1568 = vmatprep.subr.bf16.mxu0 0
      %1569 = vmatpush2.bf16.msra.mxu0 0
      %1570 = vmatprep.subr.bf16.mxu0 0
      %1571 = vmatpush2.bf16.msra.mxu0 0
      %1572 = vmatprep.subr.bf16.mxu0 0
      %1573 = vmatpush2.bf16.msra.mxu0 0
      %1574 = vmatprep.subr.bf16.mxu0 0
      %1575 = vmatpush2.bf16.msra.mxu0 0
      %1576 = vmatprep.subr.bf16.mxu0 0
      %1577 = vmatpush2.bf16.msra.mxu0 0
      %1578 = vmatprep.mubr.bf16.mxu0 0
      %1579 = vmatmul.mubr.bf16.gmra.mxu0 %v1163
      %v1580 = vpop.f32.mrf.mxu0
      %v1581 = vadd.f32 0.0, %v1580
      %v1582 = vpop.f32.mrf.mxu0
      %v1583 = vpop.f32.mrf.mxu0
      %v1584 = vadd.f32 0.0, %v1583
      %v1585 = vpop.f32.mrf.mxu0
      %1586 = vmatprep.mubr.bf16.mxu0 0
      %1587 = vmatmul.mubr.bf16.gmra.mxu0 %v1166
      %v1588 = vpop.f32.mrf.mxu0
      %v1589 = vadd.f32 0.0, %v1588
      %v1590 = vpop.f32.mrf.mxu0
      %v1591 = vpop.f32.mrf.mxu0
      %v1592 = vadd.f32 0.0, %v1591
      %v1593 = vpop.f32.mrf.mxu0
      %1594 = vmatprep.mubr.bf16.mxu0 0
      %1595 = vmatmul.mubr.bf16.gmra.mxu0 %v1169
      %v1596 = vpop.f32.mrf.mxu0
      %v1597 = vadd.f32 0.0, %v1596
      %v1598 = vpop.f32.mrf.mxu0
      %v1599 = vpop.f32.mrf.mxu0
      %v1600 = vadd.f32 0.0, %v1599
      %v1601 = vpop.f32.mrf.mxu0
      %1602 = vmatprep.mubr.bf16.mxu0 0
      %1603 = vmatmul.mubr.bf16.gmra.mxu0 %v1172
      %v1604 = vpop.f32.mrf.mxu0
      %v1605 = vadd.f32 0.0, %v1604
      %v1606 = vpop.f32.mrf.mxu0
      %v1607 = vpop.f32.mrf.mxu0
      %v1608 = vadd.f32 0.0, %v1607
      %v1609 = vpop.f32.mrf.mxu0
      %1610 = vmatprep.mubr.bf16.mxu0 0
      %1611 = vmatmul.mubr.bf16.gmra.mxu0 %v1175
      %v1612 = vpop.f32.mrf.mxu0
      %v1613 = vadd.f32 0.0, %v1612
      %v1614 = vpop.f32.mrf.mxu0
      %v1615 = vpop.f32.mrf.mxu0
      %v1616 = vadd.f32 0.0, %v1615
      %v1617 = vpop.f32.mrf.mxu0
      %1618 = vmatprep.mubr.bf16.mxu0 0
      %1619 = vmatmul.mubr.bf16.gmra.mxu0 %v1178
      %v1620 = vpop.f32.mrf.mxu0
      %v1621 = vadd.f32 0.0, %v1620
      %v1622 = vpop.f32.mrf.mxu0
      %v1623 = vpop.f32.mrf.mxu0
      %v1624 = vadd.f32 0.0, %v1623
      %v1625 = vpop.f32.mrf.mxu0
      %1626 = vmatprep.mubr.bf16.mxu0 0
      %1627 = vmatmul.mubr.bf16.gmra.mxu0 %v1181
      %v1628 = vpop.f32.mrf.mxu0
      %v1629 = vadd.f32 0.0, %v1628
      %v1630 = vpop.f32.mrf.mxu0
      %v1631 = vpop.f32.mrf.mxu0
      %v1632 = vadd.f32 0.0, %v1631
      %v1633 = vpop.f32.mrf.mxu0
      %1634 = vmatprep.mubr.bf16.mxu0 0
      %1635 = vmatmul.mubr.bf16.gmra.mxu0 %v1184
      %v1636 = vpop.f32.mrf.mxu0
      %v1637 = vadd.f32 0.0, %v1636
      %v1638 = vpop.f32.mrf.mxu0
      %v1639 = vpop.f32.mrf.mxu0
      %v1640 = vadd.f32 0.0, %v1639
      %v1641 = vpop.f32.mrf.mxu0
      %1642 = vmatprep.mubr.bf16.mxu0 0
      %1643 = vmatmul.mubr.bf16.gmra.mxu0 %v1187
      %v1644 = vpop.f32.mrf.mxu0
      %v1645 = vadd.f32 0.0, %v1644
      %v1646 = vpop.f32.mrf.mxu0
      %v1647 = vpop.f32.mrf.mxu0
      %v1648 = vadd.f32 0.0, %v1647
      %v1649 = vpop.f32.mrf.mxu0
      %1650 = vmatprep.mubr.bf16.mxu0 0
      %1651 = vmatmul.mubr.bf16.gmra.mxu0 %v1190
      %v1652 = vpop.f32.mrf.mxu0
      %v1653 = vadd.f32 0.0, %v1652
      %v1654 = vpop.f32.mrf.mxu0
      %v1655 = vpop.f32.mrf.mxu0
      %v1656 = vadd.f32 0.0, %v1655
      %v1657 = vpop.f32.mrf.mxu0
      %1658 = vmatprep.mubr.bf16.mxu0 0
      %1659 = vmatmul.mubr.bf16.gmra.mxu0 %v1193
      %v1660 = vpop.f32.mrf.mxu0
      %v1661 = vadd.f32 0.0, %v1660
      %v1662 = vpop.f32.mrf.mxu0
      %v1663 = vpop.f32.mrf.mxu0
      %v1664 = vadd.f32 0.0, %v1663
      %v1665 = vpop.f32.mrf.mxu0
      %1666 = vmatprep.mubr.bf16.mxu0 0
      %1667 = vmatmul.mubr.bf16.gmra.mxu0 %v1196
      %v1668 = vpop.f32.mrf.mxu0
      %v1669 = vadd.f32 0.0, %v1668
      %v1670 = vpop.f32.mrf.mxu0
      %v1671 = vpop.f32.mrf.mxu0
      %v1672 = vadd.f32 0.0, %v1671
      %v1673 = vpop.f32.mrf.mxu0
      %1674 = vmatprep.mubr.bf16.mxu0 0
      %1675 = vmatmul.mubr.bf16.gmra.mxu0 %v1199
      %v1676 = vpop.f32.mrf.mxu0
      %v1677 = vadd.f32 0.0, %v1676
      %v1678 = vpop.f32.mrf.mxu0
      %v1679 = vpop.f32.mrf.mxu0
      %v1680 = vadd.f32 0.0, %v1679
      %v1681 = vpop.f32.mrf.mxu0
      %1682 = vmatprep.mubr.bf16.mxu0 0
      %1683 = vmatmul.mubr.bf16.gmra.mxu0 %v1202
      %v1684 = vpop.f32.mrf.mxu0
      %v1685 = vadd.f32 0.0, %v1684
      %v1686 = vpop.f32.mrf.mxu0
      %v1687 = vpop.f32.mrf.mxu0
      %v1688 = vadd.f32 0.0, %v1687
      %v1689 = vpop.f32.mrf.mxu0
      %1690 = vmatprep.mubr.bf16.mxu0 0
      %1691 = vmatmul.mubr.bf16.gmra.mxu0 %v1205
      %v1692 = vpop.f32.mrf.mxu0
      %v1693 = vadd.f32 0.0, %v1692
      %v1694 = vpop.f32.mrf.mxu0
      %v1695 = vpop.f32.mrf.mxu0
      %v1696 = vadd.f32 0.0, %v1695
      %v1697 = vpop.f32.mrf.mxu0
      %1698 = vmatprep.mubr.bf16.mxu0 0
      %1699 = vmatmul.mubr.bf16.gmra.mxu0 %v1208
      %v1700 = vpop.f32.mrf.mxu0
      %v1701 = vadd.f32 0.0, %v1700
      %v1702 = vpop.f32.mrf.mxu0
      %v1703 = vpop.f32.mrf.mxu0
      %v1704 = vadd.f32 0.0, %v1703
      %v1705 = vpop.f32.mrf.mxu0
      %1706 = vmatprep.mubr.bf16.mxu0 0
      %1707 = vmatmul.mubr.bf16.gmra.mxu0 %v1211
      %v1708 = vpop.f32.mrf.mxu0
      %v1709 = vadd.f32 0.0, %v1708
      %v1710 = vpop.f32.mrf.mxu0
      %v1711 = vpop.f32.mrf.mxu0
      %v1712 = vadd.f32 0.0, %v1711
      %v1713 = vpop.f32.mrf.mxu0
      %1714 = vmatprep.mubr.bf16.mxu0 0
      %1715 = vmatmul.mubr.bf16.gmra.mxu0 %v1214
      %v1716 = vpop.f32.mrf.mxu0
      %v1717 = vadd.f32 0.0, %v1716
      %v1718 = vpop.f32.mrf.mxu0
      %v1719 = vpop.f32.mrf.mxu0
      %v1720 = vadd.f32 0.0, %v1719
      %v1721 = vpop.f32.mrf.mxu0
      %1722 = vmatprep.mubr.bf16.mxu0 0
      %1723 = vmatmul.mubr.bf16.gmra.mxu0 %v1217
      %v1724 = vpop.f32.mrf.mxu0
      %v1725 = vadd.f32 0.0, %v1724
      %v1726 = vpop.f32.mrf.mxu0
      %v1727 = vpop.f32.mrf.mxu0
      %v1728 = vadd.f32 0.0, %v1727
      %v1729 = vpop.f32.mrf.mxu0
      %1730 = vmatprep.mubr.bf16.mxu0 0
      %1731 = vmatmul.mubr.bf16.gmra.mxu0 %v1220
      %v1732 = vpop.f32.mrf.mxu0
      %v1733 = vadd.f32 0.0, %v1732
      %v1734 = vpop.f32.mrf.mxu0
      %v1735 = vpop.f32.mrf.mxu0
      %v1736 = vadd.f32 0.0, %v1735
      %v1737 = vpop.f32.mrf.mxu0
      %1738 = vmatprep.mubr.bf16.mxu0 0
      %1739 = vmatmul.mubr.bf16.gmra.mxu0 %v1223
      %v1740 = vpop.f32.mrf.mxu0
      %v1741 = vadd.f32 0.0, %v1740
      %v1742 = vpop.f32.mrf.mxu0
      %v1743 = vpop.f32.mrf.mxu0
      %v1744 = vadd.f32 0.0, %v1743
      %v1745 = vpop.f32.mrf.mxu0
      %1746 = vmatprep.mubr.bf16.mxu0 0
      %1747 = vmatmul.mubr.bf16.gmra.mxu0 %v1226
      %v1748 = vpop.f32.mrf.mxu0
      %v1749 = vadd.f32 0.0, %v1748
      %v1750 = vpop.f32.mrf.mxu0
      %v1751 = vpop.f32.mrf.mxu0
      %v1752 = vadd.f32 0.0, %v1751
      %v1753 = vpop.f32.mrf.mxu0
      %1754 = vmatprep.mubr.bf16.mxu0 0
      %1755 = vmatmul.mubr.bf16.gmra.mxu0 %v1229
      %v1756 = vpop.f32.mrf.mxu0
      %v1757 = vadd.f32 0.0, %v1756
      %v1758 = vpop.f32.mrf.mxu0
      %v1759 = vpop.f32.mrf.mxu0
      %v1760 = vadd.f32 0.0, %v1759
      %v1761 = vpop.f32.mrf.mxu0
      %1762 = vmatprep.mubr.bf16.mxu0 0
      %1763 = vmatmul.mubr.bf16.gmra.mxu0 %v1232
      %v1764 = vpop.f32.mrf.mxu0
      %v1765 = vadd.f32 0.0, %v1764
      %v1766 = vpop.f32.mrf.mxu0
      %v1767 = vpop.f32.mrf.mxu0
      %v1768 = vadd.f32 0.0, %v1767
      %v1769 = vpop.f32.mrf.mxu0
      %1770 = vmatprep.mubr.bf16.mxu0 0
      %1771 = vmatmul.mubr.bf16.gmra.mxu0 %v1235
      %v1772 = vpop.f32.mrf.mxu0
      %v1773 = vadd.f32 0.0, %v1772
      %v1774 = vpop.f32.mrf.mxu0
      %v1775 = vpop.f32.mrf.mxu0
      %v1776 = vadd.f32 0.0, %v1775
      %v1777 = vpop.f32.mrf.mxu0
      %1778 = vmatprep.mubr.bf16.mxu0 0
      %1779 = vmatmul.mubr.bf16.gmra.mxu0 %v1238
      %v1780 = vpop.f32.mrf.mxu0
      %v1781 = vadd.f32 0.0, %v1780
      %v1782 = vpop.f32.mrf.mxu0
      %v1783 = vpop.f32.mrf.mxu0
      %v1784 = vadd.f32 0.0, %v1783
      %v1785 = vpop.f32.mrf.mxu0
      %1786 = vmatprep.mubr.bf16.mxu0 0
      %1787 = vmatmul.mubr.bf16.gmra.mxu0 %v1241
      %v1788 = vpop.f32.mrf.mxu0
      %v1789 = vadd.f32 0.0, %v1788
      %v1790 = vpop.f32.mrf.mxu0
      %v1791 = vpop.f32.mrf.mxu0
      %v1792 = vadd.f32 0.0, %v1791
      %v1793 = vpop.f32.mrf.mxu0
      %1794 = vmatprep.mubr.bf16.mxu0 0
      %1795 = vmatmul.mubr.bf16.gmra.mxu0 %v1244
      %v1796 = vpop.f32.mrf.mxu0
      %v1797 = vadd.f32 0.0, %v1796
      %v1798 = vpop.f32.mrf.mxu0
      %v1799 = vpop.f32.mrf.mxu0
      %v1800 = vadd.f32 0.0, %v1799
      %v1801 = vpop.f32.mrf.mxu0
      %1802 = vmatprep.mubr.bf16.mxu0 0
      %1803 = vmatmul.mubr.bf16.gmra.mxu0 %v1247
      %v1804 = vpop.f32.mrf.mxu0
      %v1805 = vadd.f32 0.0, %v1804
      %v1806 = vpop.f32.mrf.mxu0
      %v1807 = vpop.f32.mrf.mxu0
      %v1808 = vadd.f32 0.0, %v1807
      %v1809 = vpop.f32.mrf.mxu0
      %1810 = vmatprep.mubr.bf16.mxu0 0
      %1811 = vmatmul.mubr.bf16.gmra.mxu0 %v1250
      %v1812 = vpop.f32.mrf.mxu0
      %v1813 = vadd.f32 0.0, %v1812
      %v1814 = vpop.f32.mrf.mxu0
      %v1815 = vpop.f32.mrf.mxu0
      %v1816 = vadd.f32 0.0, %v1815
      %v1817 = vpop.f32.mrf.mxu0
      %1818 = vmatprep.mubr.bf16.mxu0 0
      %1819 = vmatmul.mubr.bf16.gmra.mxu0 %v1253
      %v1820 = vpop.f32.mrf.mxu0
      %v1821 = vadd.f32 0.0, %v1820
      %v1822 = vpop.f32.mrf.mxu0
      %v1823 = vpop.f32.mrf.mxu0
      %v1824 = vadd.f32 0.0, %v1823
      %v1825 = vpop.f32.mrf.mxu0
      %1826 = vmatprep.mubr.bf16.mxu0 0
      %1827 = vmatmul.mubr.bf16.gmra.mxu0 %v1256
      %v1828 = vpop.f32.mrf.mxu0
      %v1829 = vadd.f32 0.0, %v1828
      %v1830 = vpop.f32.mrf.mxu0
      %v1831 = vpop.f32.mrf.mxu0
      %v1832 = vadd.f32 0.0, %v1831
      %v1833 = vpop.f32.mrf.mxu0
      %1834 = vmatprep.mubr.bf16.mxu0 0
      %1835 = vmatmul.mubr.bf16.gmra.mxu0 %v1259
      %v1836 = vpop.f32.mrf.mxu0
      %v1837 = vadd.f32 0.0, %v1836
      %v1838 = vpop.f32.mrf.mxu0
      %v1839 = vpop.f32.mrf.mxu0
      %v1840 = vadd.f32 0.0, %v1839
      %v1841 = vpop.f32.mrf.mxu0
      %1842 = vmatprep.mubr.bf16.mxu0 0
      %1843 = vmatmul.mubr.bf16.gmra.mxu0 %v1262
      %v1844 = vpop.f32.mrf.mxu0
      %v1845 = vadd.f32 0.0, %v1844
      %v1846 = vpop.f32.mrf.mxu0
      %v1847 = vpop.f32.mrf.mxu0
      %v1848 = vadd.f32 0.0, %v1847
      %v1849 = vpop.f32.mrf.mxu0
      %1850 = vmatprep.mubr.bf16.mxu0 0
      %1851 = vmatmul.mubr.bf16.gmra.mxu0 %v1265
      %v1852 = vpop.f32.mrf.mxu0
      %v1853 = vadd.f32 0.0, %v1852
      %v1854 = vpop.f32.mrf.mxu0
      %v1855 = vpop.f32.mrf.mxu0
      %v1856 = vadd.f32 0.0, %v1855
      %v1857 = vpop.f32.mrf.mxu0
      %1858 = vmatprep.mubr.bf16.mxu0 0
      %1859 = vmatmul.mubr.bf16.gmra.mxu0 %v1268
      %v1860 = vpop.f32.mrf.mxu0
      %v1861 = vadd.f32 0.0, %v1860
      %v1862 = vpop.f32.mrf.mxu0
      %v1863 = vpop.f32.mrf.mxu0
      %v1864 = vadd.f32 0.0, %v1863
      %v1865 = vpop.f32.mrf.mxu0
      %1866 = vmatprep.mubr.bf16.mxu0 0
      %1867 = vmatmul.mubr.bf16.gmra.mxu0 %v1271
      %v1868 = vpop.f32.mrf.mxu0
      %v1869 = vadd.f32 0.0, %v1868
      %v1870 = vpop.f32.mrf.mxu0
      %v1871 = vpop.f32.mrf.mxu0
      %v1872 = vadd.f32 0.0, %v1871
      %v1873 = vpop.f32.mrf.mxu0
      %1874 = vmatprep.mubr.bf16.mxu0 0
      %1875 = vmatmul.mubr.bf16.gmra.mxu0 %v1274
      %v1876 = vpop.f32.mrf.mxu0
      %v1877 = vadd.f32 0.0, %v1876
      %v1878 = vpop.f32.mrf.mxu0
      %v1879 = vpop.f32.mrf.mxu0
      %v1880 = vadd.f32 0.0, %v1879
      %v1881 = vpop.f32.mrf.mxu0
      %1882 = vmatprep.mubr.bf16.mxu0 0
      %1883 = vmatmul.mubr.bf16.gmra.mxu0 %v1277
      %v1884 = vpop.f32.mrf.mxu0
      %v1885 = vadd.f32 0.0, %v1884
      %v1886 = vpop.f32.mrf.mxu0
      %v1887 = vpop.f32.mrf.mxu0
      %v1888 = vadd.f32 0.0, %v1887
      %v1889 = vpop.f32.mrf.mxu0
      %1890 = vmatprep.mubr.bf16.mxu0 0
      %1891 = vmatmul.mubr.bf16.gmra.mxu0 %v1280
      %v1892 = vpop.f32.mrf.mxu0
      %v1893 = vadd.f32 0.0, %v1892
      %v1894 = vpop.f32.mrf.mxu0
      %v1895 = vpop.f32.mrf.mxu0
      %v1896 = vadd.f32 0.0, %v1895
      %v1897 = vpop.f32.mrf.mxu0
      %1898 = vmatprep.mubr.bf16.mxu0 0
      %1899 = vmatmul.mubr.bf16.gmra.mxu0 %v1283
      %v1900 = vpop.f32.mrf.mxu0
      %v1901 = vadd.f32 0.0, %v1900
      %v1902 = vpop.f32.mrf.mxu0
      %v1903 = vpop.f32.mrf.mxu0
      %v1904 = vadd.f32 0.0, %v1903
      %v1905 = vpop.f32.mrf.mxu0
      %1906 = vmatprep.mubr.bf16.mxu0 0
      %1907 = vmatmul.mubr.bf16.gmra.mxu0 %v1286
      %v1908 = vpop.f32.mrf.mxu0
      %v1909 = vadd.f32 0.0, %v1908
      %v1910 = vpop.f32.mrf.mxu0
      %v1911 = vpop.f32.mrf.mxu0
      %v1912 = vadd.f32 0.0, %v1911
      %v1913 = vpop.f32.mrf.mxu0
      %1914 = vmatprep.mubr.bf16.mxu0 0
      %1915 = vmatmul.mubr.bf16.gmra.mxu0 %v1289
      %v1916 = vpop.f32.mrf.mxu0
      %v1917 = vadd.f32 0.0, %v1916
      %v1918 = vpop.f32.mrf.mxu0
      %v1919 = vpop.f32.mrf.mxu0
      %v1920 = vadd.f32 0.0, %v1919
      %v1921 = vpop.f32.mrf.mxu0
      %1922 = vmatprep.mubr.bf16.mxu0 0
      %1923 = vmatmul.mubr.bf16.gmra.mxu0 %v1292
      %v1924 = vpop.f32.mrf.mxu0
      %v1925 = vadd.f32 0.0, %v1924
      %v1926 = vpop.f32.mrf.mxu0
      %v1927 = vpop.f32.mrf.mxu0
      %v1928 = vadd.f32 0.0, %v1927
      %v1929 = vpop.f32.mrf.mxu0
      %1930 = vmatprep.mubr.bf16.mxu0 0
      %1931 = vmatmul.mubr.bf16.gmra.mxu0 %v1295
      %v1932 = vpop.f32.mrf.mxu0
      %v1933 = vadd.f32 0.0, %v1932
      %v1934 = vpop.f32.mrf.mxu0
      %v1935 = vpop.f32.mrf.mxu0
      %v1936 = vadd.f32 0.0, %v1935
      %v1937 = vpop.f32.mrf.mxu0
      %1938 = vmatprep.mubr.bf16.mxu0 0
      %1939 = vmatmul.mubr.bf16.gmra.mxu0 %v1298
      %v1940 = vpop.f32.mrf.mxu0
      %v1941 = vadd.f32 0.0, %v1940
      %v1942 = vpop.f32.mrf.mxu0
      %v1943 = vpop.f32.mrf.mxu0
      %v1944 = vadd.f32 0.0, %v1943
      %v1945 = vpop.f32.mrf.mxu0
      %1946 = vmatprep.mubr.bf16.mxu0 0
      %1947 = vmatmul.mubr.bf16.gmra.mxu0 %v1301
      %v1948 = vpop.f32.mrf.mxu0
      %v1949 = vadd.f32 0.0, %v1948
      %v1950 = vpop.f32.mrf.mxu0
      %v1951 = vpop.f32.mrf.mxu0
      %v1952 = vadd.f32 0.0, %v1951
      %v1953 = vpop.f32.mrf.mxu0
      %1954 = vmatprep.mubr.bf16.mxu0 0
      %1955 = vmatmul.mubr.bf16.gmra.mxu0 %v1304
      %v1956 = vpop.f32.mrf.mxu0
      %v1957 = vadd.f32 0.0, %v1956
      %v1958 = vpop.f32.mrf.mxu0
      %v1959 = vpop.f32.mrf.mxu0
      %v1960 = vadd.f32 0.0, %v1959
      %v1961 = vpop.f32.mrf.mxu0
      %1962 = vmatprep.mubr.bf16.mxu0 0
      %1963 = vmatmul.mubr.bf16.gmra.mxu0 %v1307
      %v1964 = vpop.f32.mrf.mxu0
      %v1965 = vadd.f32 0.0, %v1964
      %v1966 = vpop.f32.mrf.mxu0
      %v1967 = vpop.f32.mrf.mxu0
      %v1968 = vadd.f32 0.0, %v1967
      %v1969 = vpop.f32.mrf.mxu0
      %1970 = vmatprep.mubr.bf16.mxu0 0
      %1971 = vmatmul.mubr.bf16.gmra.mxu0 %v1310
      %v1972 = vpop.f32.mrf.mxu0
      %v1973 = vadd.f32 0.0, %v1972
      %v1974 = vpop.f32.mrf.mxu0
      %v1975 = vpop.f32.mrf.mxu0
      %v1976 = vadd.f32 0.0, %v1975
      %v1977 = vpop.f32.mrf.mxu0
      %1978 = vmatprep.mubr.bf16.mxu0 0
      %1979 = vmatmul.mubr.bf16.gmra.mxu0 %v1313
      %v1980 = vpop.f32.mrf.mxu0
      %v1981 = vadd.f32 0.0, %v1980
      %v1982 = vpop.f32.mrf.mxu0
      %v1983 = vpop.f32.mrf.mxu0
      %v1984 = vadd.f32 0.0, %v1983
      %v1985 = vpop.f32.mrf.mxu0
      %1986 = vmatprep.mubr.bf16.mxu0 0
      %1987 = vmatmul.mubr.bf16.gmra.mxu0 %v1316
      %v1988 = vpop.f32.mrf.mxu0
      %v1989 = vadd.f32 0.0, %v1988
      %v1990 = vpop.f32.mrf.mxu0
      %v1991 = vpop.f32.mrf.mxu0
      %v1992 = vadd.f32 0.0, %v1991
      %v1993 = vpop.f32.mrf.mxu0
      %1994 = vmatprep.mubr.bf16.mxu0 0
      %1995 = vmatmul.mubr.bf16.gmra.mxu0 %v1319
      %v1996 = vpop.f32.mrf.mxu0
      %v1997 = vadd.f32 0.0, %v1996
      %v1998 = vpop.f32.mrf.mxu0
      %v1999 = vpop.f32.mrf.mxu0
      %v2000 = vadd.f32 0.0, %v1999
      %v2001 = vpop.f32.mrf.mxu0
      %2002 = vmatprep.mubr.bf16.mxu0 0
      %2003 = vmatmul.mubr.bf16.gmra.mxu0 %v1322
      %v2004 = vpop.f32.mrf.mxu0
      %v2005 = vadd.f32 0.0, %v2004
      %v2006 = vpop.f32.mrf.mxu0
      %v2007 = vpop.f32.mrf.mxu0
      %v2008 = vadd.f32 0.0, %v2007
      %v2009 = vpop.f32.mrf.mxu0
      %2010 = vmatprep.mubr.bf16.mxu0 0
      %2011 = vmatmul.mubr.bf16.gmra.mxu0 %v1325
      %v2012 = vpop.f32.mrf.mxu0
      %v2013 = vadd.f32 0.0, %v2012
      %v2014 = vpop.f32.mrf.mxu0
      %v2015 = vpop.f32.mrf.mxu0
      %v2016 = vadd.f32 0.0, %v2015
      %v2017 = vpop.f32.mrf.mxu0
      %2018 = vmatprep.mubr.bf16.mxu0 0
      %2019 = vmatmul.mubr.bf16.gmra.mxu0 %v1328
      %v2020 = vpop.f32.mrf.mxu0
      %v2021 = vadd.f32 0.0, %v2020
      %v2022 = vpop.f32.mrf.mxu0
      %v2023 = vpop.f32.mrf.mxu0
      %v2024 = vadd.f32 0.0, %v2023
      %v2025 = vpop.f32.mrf.mxu0
      %2026 = vmatprep.mubr.bf16.mxu0 0
      %2027 = vmatmul.mubr.bf16.gmra.mxu0 %v1331
      %v2028 = vpop.f32.mrf.mxu0
      %v2029 = vadd.f32 0.0, %v2028
      %v2030 = vpop.f32.mrf.mxu0
      %v2031 = vpop.f32.mrf.mxu0
      %v2032 = vadd.f32 0.0, %v2031
      %v2033 = vpop.f32.mrf.mxu0
      %2034 = vmatprep.mubr.bf16.mxu0 0
      %2035 = vmatmul.mubr.bf16.gmra.mxu0 %v1334
      %v2036 = vpop.f32.mrf.mxu0
      %v2037 = vadd.f32 0.0, %v2036
      %v2038 = vpop.f32.mrf.mxu0
      %v2039 = vpop.f32.mrf.mxu0
      %v2040 = vadd.f32 0.0, %v2039
      %v2041 = vpop.f32.mrf.mxu0
      %2042 = vmatprep.mubr.bf16.mxu0 0
      %2043 = vmatmul.mubr.bf16.gmra.mxu0 %v1337
      %v2044 = vpop.f32.mrf.mxu0
      %v2045 = vadd.f32 0.0, %v2044
      %v2046 = vpop.f32.mrf.mxu0
      %v2047 = vpop.f32.mrf.mxu0
      %v2048 = vadd.f32 0.0, %v2047
      %v2049 = vpop.f32.mrf.mxu0
      %2050 = vmatprep.mubr.bf16.mxu0 0
      %2051 = vmatmul.mubr.bf16.gmra.mxu0 %v1340
      %v2052 = vpop.f32.mrf.mxu0
      %v2053 = vadd.f32 0.0, %v2052
      %v2054 = vpop.f32.mrf.mxu0
      %v2055 = vpop.f32.mrf.mxu0
      %v2056 = vadd.f32 0.0, %v2055
      %v2057 = vpop.f32.mrf.mxu0
      %2058 = vmatprep.mubr.bf16.mxu0 0
      %2059 = vmatmul.mubr.bf16.gmra.mxu0 %v1343
      %v2060 = vpop.f32.mrf.mxu0
      %v2061 = vadd.f32 0.0, %v2060
      %v2062 = vpop.f32.mrf.mxu0
      %v2063 = vpop.f32.mrf.mxu0
      %v2064 = vadd.f32 0.0, %v2063
      %v2065 = vpop.f32.mrf.mxu0
      %2066 = vmatprep.mubr.bf16.mxu0 0
      %2067 = vmatmul.mubr.bf16.gmra.mxu0 %v1346
      %v2068 = vpop.f32.mrf.mxu0
      %v2069 = vadd.f32 0.0, %v2068
      %v2070 = vpop.f32.mrf.mxu0
      %v2071 = vpop.f32.mrf.mxu0
      %v2072 = vadd.f32 0.0, %v2071
      %v2073 = vpop.f32.mrf.mxu0
      %2074 = vmatprep.mubr.bf16.mxu0 0
      %2075 = vmatmul.mubr.bf16.gmra.mxu0 %v1349
      %v2076 = vpop.f32.mrf.mxu0
      %v2077 = vadd.f32 0.0, %v2076
      %v2078 = vpop.f32.mrf.mxu0
      %v2079 = vpop.f32.mrf.mxu0
      %v2080 = vadd.f32 0.0, %v2079
      %v2081 = vpop.f32.mrf.mxu0
      %2082 = vmatprep.mubr.bf16.mxu0 0
      %2083 = vmatmul.mubr.bf16.gmra.mxu0 %v1352
      %v2084 = vpop.f32.mrf.mxu0
      %v2085 = vadd.f32 0.0, %v2084
      %v2086 = vpop.f32.mrf.mxu0
      %v2087 = vpop.f32.mrf.mxu0
      %v2088 = vadd.f32 0.0, %v2087
      %v2089 = vpop.f32.mrf.mxu0
      %2090 = vmatprep.mubr.bf16.mxu0 0
      %2091 = vmatmul.mubr.bf16.gmra.mxu0 %v1355
      %v2092 = vpop.f32.mrf.mxu0
      %v2093 = vadd.f32 0.0, %v2092
      %v2094 = vpop.f32.mrf.mxu0
      %v2095 = vpop.f32.mrf.mxu0
      %v2096 = vadd.f32 0.0, %v2095
      %v2097 = vpop.f32.mrf.mxu0
      %2098 = vmatprep.mubr.bf16.mxu0 0
      %2099 = vmatmul.mubr.bf16.gmra.mxu0 %v1358
      %v2100 = vpop.f32.mrf.mxu0
      %v2101 = vadd.f32 0.0, %v2100
      %v2102 = vpop.f32.mrf.mxu0
      %v2103 = vpop.f32.mrf.mxu0
      %v2104 = vadd.f32 0.0, %v2103
      %v2105 = vpop.f32.mrf.mxu0
      %2106 = vmatprep.mubr.bf16.mxu0 0
      %2107 = vmatmul.mubr.bf16.gmra.mxu0 %v1361
      %v2108 = vpop.f32.mrf.mxu0
      %v2109 = vadd.f32 0.0, %v2108
      %v2110 = vpop.f32.mrf.mxu0
      %v2111 = vpop.f32.mrf.mxu0
      %v2112 = vadd.f32 0.0, %v2111
      %v2113 = vpop.f32.mrf.mxu0
      %2114 = vmatprep.mubr.bf16.mxu0 0
      %2115 = vmatmul.mubr.bf16.gmra.mxu0 %v1364
      %v2116 = vpop.f32.mrf.mxu0
      %v2117 = vadd.f32 0.0, %v2116
      %v2118 = vpop.f32.mrf.mxu0
      %v2119 = vpop.f32.mrf.mxu0
      %v2120 = vadd.f32 0.0, %v2119
      %v2121 = vpop.f32.mrf.mxu0
      %2122 = vmatprep.mubr.bf16.mxu0 0
      %2123 = vmatmul.mubr.bf16.gmra.mxu0 %v1367
      %v2124 = vpop.f32.mrf.mxu0
      %v2125 = vadd.f32 0.0, %v2124
      %v2126 = vpop.f32.mrf.mxu0
      %v2127 = vpop.f32.mrf.mxu0
      %v2128 = vadd.f32 0.0, %v2127
      %v2129 = vpop.f32.mrf.mxu0
      %2130 = vmatprep.mubr.bf16.mxu0 0
      %2131 = vmatmul.mubr.bf16.gmra.mxu0 %v1370
      %v2132 = vpop.f32.mrf.mxu0
      %v2133 = vadd.f32 0.0, %v2132
      %v2134 = vpop.f32.mrf.mxu0
      %v2135 = vpop.f32.mrf.mxu0
      %v2136 = vadd.f32 0.0, %v2135
      %v2137 = vpop.f32.mrf.mxu0
      %2138 = vmatprep.mubr.bf16.mxu0 0
      %2139 = vmatmul.mubr.bf16.gmra.mxu0 %v1373
      %v2140 = vpop.f32.mrf.mxu0
      %v2141 = vadd.f32 0.0, %v2140
      %v2142 = vpop.f32.mrf.mxu0
      %v2143 = vpop.f32.mrf.mxu0
      %v2144 = vadd.f32 0.0, %v2143
      %v2145 = vpop.f32.mrf.mxu0
      %2146 = vmatprep.mubr.bf16.mxu0 0
      %2147 = vmatmul.mubr.bf16.gmra.mxu0 %v1376
      %v2148 = vpop.f32.mrf.mxu0
      %v2149 = vadd.f32 0.0, %v2148
      %v2150 = vpop.f32.mrf.mxu0
      %v2151 = vpop.f32.mrf.mxu0
      %v2152 = vadd.f32 0.0, %v2151
      %v2153 = vpop.f32.mrf.mxu0
      %2154 = vmatprep.mubr.bf16.mxu0 0
      %2155 = vmatmul.mubr.bf16.gmra.mxu0 %v1379
      %v2156 = vpop.f32.mrf.mxu0
      %v2157 = vadd.f32 0.0, %v2156
      %v2158 = vpop.f32.mrf.mxu0
      %v2159 = vpop.f32.mrf.mxu0
      %v2160 = vadd.f32 0.0, %v2159
      %v2161 = vpop.f32.mrf.mxu0
      %2162 = vmatprep.mubr.bf16.mxu0 0
      %2163 = vmatmul.mubr.bf16.gmra.mxu0 %v1382
      %v2164 = vpop.f32.mrf.mxu0
      %v2165 = vadd.f32 0.0, %v2164
      %v2166 = vpop.f32.mrf.mxu0
      %v2167 = vpop.f32.mrf.mxu0
      %v2168 = vadd.f32 0.0, %v2167
      %v2169 = vpop.f32.mrf.mxu0
      %2170 = vmatprep.mubr.bf16.mxu0 0
      %2171 = vmatmul.mubr.bf16.gmra.mxu0 %v1385
      %v2172 = vpop.f32.mrf.mxu0
      %v2173 = vadd.f32 0.0, %v2172
      %v2174 = vpop.f32.mrf.mxu0
      %v2175 = vpop.f32.mrf.mxu0
      %v2176 = vadd.f32 0.0, %v2175
      %v2177 = vpop.f32.mrf.mxu0
      %2178 = vmatprep.mubr.bf16.mxu0 0
      %2179 = vmatmul.mubr.bf16.gmra.mxu0 %v1388
      %v2180 = vpop.f32.mrf.mxu0
      %v2181 = vadd.f32 0.0, %v2180
      %v2182 = vpop.f32.mrf.mxu0
      %v2183 = vpop.f32.mrf.mxu0
      %v2184 = vadd.f32 0.0, %v2183
      %v2185 = vpop.f32.mrf.mxu0
      %2186 = vmatprep.mubr.bf16.mxu0 0
      %2187 = vmatmul.mubr.bf16.gmra.mxu0 %v1391
      %v2188 = vpop.f32.mrf.mxu0
      %v2189 = vadd.f32 0.0, %v2188
      %v2190 = vpop.f32.mrf.mxu0
      %v2191 = vpop.f32.mrf.mxu0
      %v2192 = vadd.f32 0.0, %v2191
      %v2193 = vpop.f32.mrf.mxu0
      %2194 = vmatprep.mubr.bf16.mxu0 0
      %2195 = vmatmul.mubr.bf16.gmra.mxu0 %v1394
      %v2196 = vpop.f32.mrf.mxu0
      %v2197 = vadd.f32 0.0, %v2196
      %v2198 = vpop.f32.mrf.mxu0
      %v2199 = vpop.f32.mrf.mxu0
      %v2200 = vadd.f32 0.0, %v2199
      %v2201 = vpop.f32.mrf.mxu0
      %2202 = vmatprep.mubr.bf16.mxu0 0
      %2203 = vmatmul.mubr.bf16.gmra.mxu0 %v1397
      %v2204 = vpop.f32.mrf.mxu0
      %v2205 = vadd.f32 0.0, %v2204
      %v2206 = vpop.f32.mrf.mxu0
      %v2207 = vpop.f32.mrf.mxu0
      %v2208 = vadd.f32 0.0, %v2207
      %v2209 = vpop.f32.mrf.mxu0
      %2210 = vmatprep.mubr.bf16.mxu0 0
      %2211 = vmatmul.mubr.bf16.gmra.mxu0 %v1400
      %v2212 = vpop.f32.mrf.mxu0
      %v2213 = vadd.f32 0.0, %v2212
      %v2214 = vpop.f32.mrf.mxu0
      %v2215 = vpop.f32.mrf.mxu0
      %v2216 = vadd.f32 0.0, %v2215
      %v2217 = vpop.f32.mrf.mxu0
      %2218 = vmatprep.mubr.bf16.mxu0 0
      %2219 = vmatmul.mubr.bf16.gmra.mxu0 %v1403
      %v2220 = vpop.f32.mrf.mxu0
      %v2221 = vadd.f32 0.0, %v2220
      %v2222 = vpop.f32.mrf.mxu0
      %v2223 = vpop.f32.mrf.mxu0
      %v2224 = vadd.f32 0.0, %v2223
      %v2225 = vpop.f32.mrf.mxu0
      %2226 = vmatprep.mubr.bf16.mxu0 0
      %2227 = vmatmul.mubr.bf16.gmra.mxu0 %v1406
      %v2228 = vpop.f32.mrf.mxu0
      %v2229 = vadd.f32 0.0, %v2228
      %v2230 = vpop.f32.mrf.mxu0
      %v2231 = vpop.f32.mrf.mxu0
      %v2232 = vadd.f32 0.0, %v2231
      %v2233 = vpop.f32.mrf.mxu0
      %2234 = vmatprep.mubr.bf16.mxu0 0
      %2235 = vmatmul.mubr.bf16.gmra.mxu0 %v1409
      %v2236 = vpop.f32.mrf.mxu0
      %v2237 = vadd.f32 0.0, %v2236
      %v2238 = vpop.f32.mrf.mxu0
      %v2239 = vpop.f32.mrf.mxu0
      %v2240 = vadd.f32 0.0, %v2239
      %v2241 = vpop.f32.mrf.mxu0
      %2242 = vmatprep.mubr.bf16.mxu0 0
      %2243 = vmatmul.mubr.bf16.gmra.mxu0 %v1412
      %v2244 = vpop.f32.mrf.mxu0
      %v2245 = vadd.f32 0.0, %v2244
      %v2246 = vpop.f32.mrf.mxu0
      %v2247 = vpop.f32.mrf.mxu0
      %v2248 = vadd.f32 0.0, %v2247
      %v2249 = vpop.f32.mrf.mxu0
      %2250 = vmatprep.mubr.bf16.mxu0 0
      %2251 = vmatmul.mubr.bf16.gmra.mxu0 %v1415
      %v2252 = vpop.f32.mrf.mxu0
      %v2253 = vadd.f32 0.0, %v2252
      %v2254 = vpop.f32.mrf.mxu0
      %v2255 = vpop.f32.mrf.mxu0
      %v2256 = vadd.f32 0.0, %v2255
      %v2257 = vpop.f32.mrf.mxu0
      %2258 = vmatprep.mubr.bf16.mxu0 0
      %2259 = vmatmul.mubr.bf16.gmra.mxu0 %v1418
      %v2260 = vpop.f32.mrf.mxu0
      %v2261 = vadd.f32 0.0, %v2260
      %v2262 = vpop.f32.mrf.mxu0
      %v2263 = vpop.f32.mrf.mxu0
      %v2264 = vadd.f32 0.0, %v2263
      %v2265 = vpop.f32.mrf.mxu0
      %2266 = vmatprep.mubr.bf16.mxu0 0
      %2267 = vmatmul.mubr.bf16.gmra.mxu0 %v1421
      %v2268 = vpop.f32.mrf.mxu0
      %v2269 = vadd.f32 0.0, %v2268
      %v2270 = vpop.f32.mrf.mxu0
      %v2271 = vpop.f32.mrf.mxu0
      %v2272 = vadd.f32 0.0, %v2271
      %v2273 = vpop.f32.mrf.mxu0
      %2274 = vmatprep.mubr.bf16.mxu0 0
      %2275 = vmatmul.mubr.bf16.gmra.mxu0 %v1424
      %v2276 = vpop.f32.mrf.mxu0
      %v2277 = vadd.f32 0.0, %v2276
      %v2278 = vpop.f32.mrf.mxu0
      %v2279 = vpop.f32.mrf.mxu0
      %v2280 = vadd.f32 0.0, %v2279
      %v2281 = vpop.f32.mrf.mxu0
      %2282 = vmatprep.mubr.bf16.mxu0 0
      %2283 = vmatmul.mubr.bf16.gmra.mxu0 %v1427
      %v2284 = vpop.f32.mrf.mxu0
      %v2285 = vadd.f32 0.0, %v2284
      %v2286 = vpop.f32.mrf.mxu0
      %v2287 = vpop.f32.mrf.mxu0
      %v2288 = vadd.f32 0.0, %v2287
      %v2289 = vpop.f32.mrf.mxu0
      %2290 = vmatprep.mubr.bf16.mxu0 0
      %2291 = vmatmul.mubr.bf16.gmra.mxu0 %v1430
      %v2292 = vpop.f32.mrf.mxu0
      %v2293 = vadd.f32 0.0, %v2292
      %v2294 = vpop.f32.mrf.mxu0
      %v2295 = vpop.f32.mrf.mxu0
      %v2296 = vadd.f32 0.0, %v2295
      %v2297 = vpop.f32.mrf.mxu0
      %2298 = vmatprep.mubr.bf16.mxu0 0
      %2299 = vmatmul.mubr.bf16.gmra.mxu0 %v1433
      %v2300 = vpop.f32.mrf.mxu0
      %v2301 = vadd.f32 0.0, %v2300
      %v2302 = vpop.f32.mrf.mxu0
      %v2303 = vpop.f32.mrf.mxu0
      %v2304 = vadd.f32 0.0, %v2303
      %v2305 = vpop.f32.mrf.mxu0
      %2306 = vmatprep.mubr.bf16.mxu0 0
      %2307 = vmatmul.mubr.bf16.gmra.mxu0 %v1436
      %v2308 = vpop.f32.mrf.mxu0
      %v2309 = vadd.f32 0.0, %v2308
      %v2310 = vpop.f32.mrf.mxu0
      %v2311 = vpop.f32.mrf.mxu0
      %v2312 = vadd.f32 0.0, %v2311
      %v2313 = vpop.f32.mrf.mxu0
      %2314 = vmatprep.mubr.bf16.mxu0 0
      %2315 = vmatmul.mubr.bf16.gmra.mxu0 %v1439
      %v2316 = vpop.f32.mrf.mxu0
      %v2317 = vadd.f32 0.0, %v2316
      %v2318 = vpop.f32.mrf.mxu0
      %v2319 = vpop.f32.mrf.mxu0
      %v2320 = vadd.f32 0.0, %v2319
      %v2321 = vpop.f32.mrf.mxu0
      %2322 = vmatprep.mubr.bf16.mxu0 0
      %2323 = vmatmul.mubr.bf16.gmra.mxu0 %v1442
      %v2324 = vpop.f32.mrf.mxu0
      %v2325 = vadd.f32 0.0, %v2324
      %v2326 = vpop.f32.mrf.mxu0
      %v2327 = vpop.f32.mrf.mxu0
      %v2328 = vadd.f32 0.0, %v2327
      %v2329 = vpop.f32.mrf.mxu0
      %2330 = vmatprep.mubr.bf16.mxu0 0
      %2331 = vmatmul.mubr.bf16.gmra.mxu0 %v1445
      %v2332 = vpop.f32.mrf.mxu0
      %v2333 = vadd.f32 0.0, %v2332
      %v2334 = vpop.f32.mrf.mxu0
      %v2335 = vpop.f32.mrf.mxu0
      %v2336 = vadd.f32 0.0, %v2335
      %v2337 = vpop.f32.mrf.mxu0
      %2338 = vmatprep.mubr.bf16.mxu0 0
      %2339 = vmatmul.mubr.bf16.gmra.mxu0 %v1448
      %v2340 = vpop.f32.mrf.mxu0
      %v2341 = vadd.f32 0.0, %v2340
      %v2342 = vpop.f32.mrf.mxu0
      %v2343 = vpop.f32.mrf.mxu0
      %v2344 = vadd.f32 0.0, %v2343
      %v2345 = vpop.f32.mrf.mxu0
      %2346 = vmatprep.mubr.bf16.mxu0 0
      %2347 = vmatmul.mubr.bf16.gmra.mxu0 %v1451
      %v2348 = vpop.f32.mrf.mxu0
      %v2349 = vadd.f32 0.0, %v2348
      %v2350 = vpop.f32.mrf.mxu0
      %v2351 = vpop.f32.mrf.mxu0
      %v2352 = vadd.f32 0.0, %v2351
      %v2353 = vpop.f32.mrf.mxu0
      %2354 = vmatprep.mubr.bf16.mxu0 0
      %2355 = vmatmul.mubr.bf16.gmra.mxu0 %v1454
      %v2356 = vpop.f32.mrf.mxu0
      %v2357 = vadd.f32 0.0, %v2356
      %v2358 = vpop.f32.mrf.mxu0
      %v2359 = vpop.f32.mrf.mxu0
      %v2360 = vadd.f32 0.0, %v2359
      %v2361 = vpop.f32.mrf.mxu0
      %2362 = vmatprep.mubr.bf16.mxu0 0
      %2363 = vmatmul.mubr.bf16.gmra.mxu0 %v1457
      %v2364 = vpop.f32.mrf.mxu0
      %v2365 = vadd.f32 0.0, %v2364
      %v2366 = vpop.f32.mrf.mxu0
      %v2367 = vpop.f32.mrf.mxu0
      %v2368 = vadd.f32 0.0, %v2367
      %v2369 = vpop.f32.mrf.mxu0
      %2370 = vmatprep.mubr.bf16.mxu0 0
      %2371 = vmatmul.mubr.bf16.gmra.mxu0 %v1460
      %v2372 = vpop.f32.mrf.mxu0
      %v2373 = vadd.f32 0.0, %v2372
      %v2374 = vpop.f32.mrf.mxu0
      %v2375 = vpop.f32.mrf.mxu0
      %v2376 = vadd.f32 0.0, %v2375
      %v2377 = vpop.f32.mrf.mxu0
      %2378 = vmatprep.mubr.bf16.mxu0 0
      %2379 = vmatmul.mubr.bf16.gmra.mxu0 %v1463
      %v2380 = vpop.f32.mrf.mxu0
      %v2381 = vadd.f32 0.0, %v2380
      %v2382 = vpop.f32.mrf.mxu0
      %v2383 = vpop.f32.mrf.mxu0
      %v2384 = vadd.f32 0.0, %v2383
      %v2385 = vpop.f32.mrf.mxu0
      %2386 = vmatprep.mubr.bf16.mxu0 0
      %2387 = vmatmul.mubr.bf16.gmra.mxu0 %v1466
      %v2388 = vpop.f32.mrf.mxu0
      %v2389 = vadd.f32 0.0, %v2388
      %v2390 = vpop.f32.mrf.mxu0
      %v2391 = vpop.f32.mrf.mxu0
      %v2392 = vadd.f32 0.0, %v2391
      %v2393 = vpop.f32.mrf.mxu0
      %2394 = vmatprep.mubr.bf16.mxu0 0
      %2395 = vmatmul.mubr.bf16.gmra.mxu0 %v1469
      %v2396 = vpop.f32.mrf.mxu0
      %v2397 = vadd.f32 0.0, %v2396
      %v2398 = vpop.f32.mrf.mxu0
      %v2399 = vpop.f32.mrf.mxu0
      %v2400 = vadd.f32 0.0, %v2399
      %v2401 = vpop.f32.mrf.mxu0
      %2402 = vmatprep.mubr.bf16.mxu0 0
      %2403 = vmatmul.mubr.bf16.gmra.mxu0 %v1472
      %v2404 = vpop.f32.mrf.mxu0
      %v2405 = vadd.f32 0.0, %v2404
      %v2406 = vpop.f32.mrf.mxu0
      %v2407 = vpop.f32.mrf.mxu0
      %v2408 = vadd.f32 0.0, %v2407
      %v2409 = vpop.f32.mrf.mxu0
      %2410 = vmatprep.mubr.bf16.mxu0 0
      %2411 = vmatmul.mubr.bf16.gmra.mxu0 %v1475
      %v2412 = vpop.f32.mrf.mxu0
      %v2413 = vadd.f32 0.0, %v2412
      %v2414 = vpop.f32.mrf.mxu0
      %v2415 = vpop.f32.mrf.mxu0
      %v2416 = vadd.f32 0.0, %v2415
      %v2417 = vpop.f32.mrf.mxu0
      %2418 = vmatprep.mubr.bf16.mxu0 0
      %2419 = vmatmul.mubr.bf16.gmra.mxu0 %v1478
      %v2420 = vpop.f32.mrf.mxu0
      %v2421 = vadd.f32 0.0, %v2420
      %v2422 = vpop.f32.mrf.mxu0
      %v2423 = vpop.f32.mrf.mxu0
      %v2424 = vadd.f32 0.0, %v2423
      %v2425 = vpop.f32.mrf.mxu0
      %2426 = vmatprep.mubr.bf16.mxu0 0
      %2427 = vmatmul.mubr.bf16.gmra.mxu0 %v1481
      %v2428 = vpop.f32.mrf.mxu0
      %v2429 = vadd.f32 0.0, %v2428
      %v2430 = vpop.f32.mrf.mxu0
      %v2431 = vpop.f32.mrf.mxu0
      %v2432 = vadd.f32 0.0, %v2431
      %v2433 = vpop.f32.mrf.mxu0
      %2434 = vmatprep.mubr.bf16.mxu0 0
      %2435 = vmatmul.mubr.bf16.gmra.mxu0 %v1484
      %v2436 = vpop.f32.mrf.mxu0
      %v2437 = vadd.f32 0.0, %v2436
      %v2438 = vpop.f32.mrf.mxu0
      %v2439 = vpop.f32.mrf.mxu0
      %v2440 = vadd.f32 0.0, %v2439
      %v2441 = vpop.f32.mrf.mxu0
      %2442 = vmatprep.mubr.bf16.mxu0 0
      %2443 = vmatmul.mubr.bf16.gmra.mxu0 %v1487
      %v2444 = vpop.f32.mrf.mxu0
      %v2445 = vadd.f32 0.0, %v2444
      %v2446 = vpop.f32.mrf.mxu0
      %v2447 = vpop.f32.mrf.mxu0
      %v2448 = vadd.f32 0.0, %v2447
      %v2449 = vpop.f32.mrf.mxu0
      %2450 = vmatprep.mubr.bf16.mxu0 0
      %2451 = vmatmul.mubr.bf16.gmra.mxu0 %v1490
      %v2452 = vpop.f32.mrf.mxu0
      %v2453 = vadd.f32 0.0, %v2452
      %v2454 = vpop.f32.mrf.mxu0
      %v2455 = vpop.f32.mrf.mxu0
      %v2456 = vadd.f32 0.0, %v2455
      %v2457 = vpop.f32.mrf.mxu0
      %2458 = vmatprep.mubr.bf16.mxu0 0
      %2459 = vmatmul.mubr.bf16.gmra.mxu0 %v1493
      %v2460 = vpop.f32.mrf.mxu0
      %v2461 = vadd.f32 0.0, %v2460
      %v2462 = vpop.f32.mrf.mxu0
      %v2463 = vpop.f32.mrf.mxu0
      %v2464 = vadd.f32 0.0, %v2463
      %v2465 = vpop.f32.mrf.mxu0
      %2466 = vmatprep.mubr.bf16.mxu0 0
      %2467 = vmatmul.mubr.bf16.gmra.mxu0 %v1496
      %v2468 = vpop.f32.mrf.mxu0
      %v2469 = vadd.f32 0.0, %v2468
      %v2470 = vpop.f32.mrf.mxu0
      %v2471 = vpop.f32.mrf.mxu0
      %v2472 = vadd.f32 0.0, %v2471
      %v2473 = vpop.f32.mrf.mxu0
      %2474 = vmatprep.mubr.bf16.mxu0 0
      %2475 = vmatmul.mubr.bf16.gmra.mxu0 %v1499
      %v2476 = vpop.f32.mrf.mxu0
      %v2477 = vadd.f32 0.0, %v2476
      %v2478 = vpop.f32.mrf.mxu0
      %v2479 = vpop.f32.mrf.mxu0
      %v2480 = vadd.f32 0.0, %v2479
      %v2481 = vpop.f32.mrf.mxu0
      %2482 = vmatprep.mubr.bf16.mxu0 0
      %2483 = vmatmul.mubr.bf16.gmra.mxu0 %v1502
      %v2484 = vpop.f32.mrf.mxu0
      %v2485 = vadd.f32 0.0, %v2484
      %v2486 = vpop.f32.mrf.mxu0
      %v2487 = vpop.f32.mrf.mxu0
      %v2488 = vadd.f32 0.0, %v2487
      %v2489 = vpop.f32.mrf.mxu0
      %2490 = vmatprep.mubr.bf16.mxu0 0
      %2491 = vmatmul.mubr.bf16.gmra.mxu0 %v1505
      %v2492 = vpop.f32.mrf.mxu0
      %v2493 = vadd.f32 0.0, %v2492
      %v2494 = vpop.f32.mrf.mxu0
      %v2495 = vpop.f32.mrf.mxu0
      %v2496 = vadd.f32 0.0, %v2495
      %v2497 = vpop.f32.mrf.mxu0
      %2498 = vmatprep.mubr.bf16.mxu0 0
      %2499 = vmatmul.mubr.bf16.gmra.mxu0 %v1508
      %v2500 = vpop.f32.mrf.mxu0
      %v2501 = vadd.f32 0.0, %v2500
      %v2502 = vpop.f32.mrf.mxu0
      %v2503 = vpop.f32.mrf.mxu0
      %v2504 = vadd.f32 0.0, %v2503
      %v2505 = vpop.f32.mrf.mxu0
      %2506 = vmatprep.mubr.bf16.mxu0 0
      %2507 = vmatmul.mubr.bf16.gmra.mxu0 %v1511
      %v2508 = vpop.f32.mrf.mxu0
      %v2509 = vadd.f32 0.0, %v2508
      %v2510 = vpop.f32.mrf.mxu0
      %v2511 = vpop.f32.mrf.mxu0
      %v2512 = vadd.f32 0.0, %v2511
      %v2513 = vpop.f32.mrf.mxu0
      %2514 = vmatprep.mubr.bf16.mxu0 0
      %2515 = vmatmul.mubr.bf16.gmra.mxu0 %v1514
      %v2516 = vpop.f32.mrf.mxu0
      %v2517 = vadd.f32 0.0, %v2516
      %v2518 = vpop.f32.mrf.mxu0
      %v2519 = vpop.f32.mrf.mxu0
      %v2520 = vadd.f32 0.0, %v2519
      %v2521 = vpop.f32.mrf.mxu0
      %2522 = vmatprep.mubr.bf16.mxu0 0
      %2523 = vmatmul.mubr.bf16.gmra.mxu0 %v1517
      %v2524 = vpop.f32.mrf.mxu0
      %v2525 = vadd.f32 0.0, %v2524
      %v2526 = vpop.f32.mrf.mxu0
      %v2527 = vpop.f32.mrf.mxu0
      %v2528 = vadd.f32 0.0, %v2527
      %v2529 = vpop.f32.mrf.mxu0
      %2530 = vmatprep.mubr.bf16.mxu0 0
      %2531 = vmatmul.mubr.bf16.gmra.mxu0 %v1520
      %v2532 = vpop.f32.mrf.mxu0
      %v2533 = vadd.f32 0.0, %v2532
      %v2534 = vpop.f32.mrf.mxu0
      %v2535 = vpop.f32.mrf.mxu0
      %v2536 = vadd.f32 0.0, %v2535
      %v2537 = vpop.f32.mrf.mxu0
      %2538 = vmatprep.mubr.bf16.mxu0 0
      %2539 = vmatmul.mubr.bf16.gmra.mxu0 %v1523
      %v2540 = vpop.f32.mrf.mxu0
      %v2541 = vadd.f32 0.0, %v2540
      %v2542 = vpop.f32.mrf.mxu0
      %v2543 = vpop.f32.mrf.mxu0
      %v2544 = vadd.f32 0.0, %v2543
      %v2545 = vpop.f32.mrf.mxu0
      %2546 = vmatprep.mubr.bf16.mxu0 0
      %2547 = vmatmul.mubr.bf16.gmra.mxu0 %v1526
      %v2548 = vpop.f32.mrf.mxu0
      %v2549 = vadd.f32 0.0, %v2548
      %v2550 = vpop.f32.mrf.mxu0
      %v2551 = vpop.f32.mrf.mxu0
      %v2552 = vadd.f32 0.0, %v2551
      %v2553 = vpop.f32.mrf.mxu0
      %2554 = vmatprep.mubr.bf16.mxu0 0
      %2555 = vmatmul.mubr.bf16.gmra.mxu0 %v1529
      %v2556 = vpop.f32.mrf.mxu0
      %v2557 = vadd.f32 0.0, %v2556
      %v2558 = vpop.f32.mrf.mxu0
      %v2559 = vpop.f32.mrf.mxu0
      %v2560 = vadd.f32 0.0, %v2559
      %v2561 = vpop.f32.mrf.mxu0
      %2562 = vmatprep.mubr.bf16.mxu0 0
      %2563 = vmatmul.mubr.bf16.gmra.mxu0 %v1532
      %v2564 = vpop.f32.mrf.mxu0
      %v2565 = vadd.f32 0.0, %v2564
      %v2566 = vpop.f32.mrf.mxu0
      %v2567 = vpop.f32.mrf.mxu0
      %v2568 = vadd.f32 0.0, %v2567
      %v2569 = vpop.f32.mrf.mxu0
      %2570 = vmatprep.mubr.bf16.mxu0 0
      %2571 = vmatmul.mubr.bf16.gmra.mxu0 %v1535
      %v2572 = vpop.f32.mrf.mxu0
      %v2573 = vadd.f32 0.0, %v2572
      %v2574 = vpop.f32.mrf.mxu0
      %v2575 = vpop.f32.mrf.mxu0
      %v2576 = vadd.f32 0.0, %v2575
      %v2577 = vpop.f32.mrf.mxu0
      %2578 = vmatprep.mubr.bf16.mxu0 0
      %2579 = vmatmul.mubr.bf16.gmra.mxu0 %v1538
      %v2580 = vpop.f32.mrf.mxu0
      %v2581 = vadd.f32 0.0, %v2580
      %v2582 = vpop.f32.mrf.mxu0
      %v2583 = vpop.f32.mrf.mxu0
      %v2584 = vadd.f32 0.0, %v2583
      %v2585 = vpop.f32.mrf.mxu0
      %2586 = vmatprep.mubr.bf16.mxu0 0
      %2587 = vmatmul.mubr.bf16.gmra.mxu0 %v1541
      %v2588 = vpop.f32.mrf.mxu0
      %v2589 = vadd.f32 0.0, %v2588
      %v2590 = vpop.f32.mrf.mxu0
      %v2591 = vpop.f32.mrf.mxu0
      %v2592 = vadd.f32 0.0, %v2591
      %v2593 = vpop.f32.mrf.mxu0
      %2594 = vmatprep.mubr.bf16.mxu0 0
      %2595 = vmatmul.mubr.bf16.gmra.mxu0 %v1544
      %v2596 = vpop.f32.mrf.mxu0
      %v2597 = vadd.f32 0.0, %v2596
      %v2598 = vpop.f32.mrf.mxu0
      %v2599 = vpop.f32.mrf.mxu0
      %v2600 = vadd.f32 0.0, %v2599
      %v2601 = vpop.f32.mrf.mxu0
      %2602 = vdwg.mxu0
      %v2603 = vmax.f32 %v1581, 0.0
      %v2604 = vmax.f32 %v1584, 0.0
      %v2605 = vmax.f32 %v1589, 0.0
      %v2606 = vmax.f32 %v1592, 0.0
      %v2607 = vmax.f32 %v1597, 0.0
      %v2608 = vmax.f32 %v1600, 0.0
      %v2609 = vmax.f32 %v1605, 0.0
      %v2610 = vmax.f32 %v1608, 0.0
      %v2611 = vmax.f32 %v1613, 0.0
      %v2612 = vmax.f32 %v1616, 0.0
      %v2613 = vmax.f32 %v1621, 0.0
      %v2614 = vmax.f32 %v1624, 0.0
      %v2615 = vmax.f32 %v1629, 0.0
      %v2616 = vmax.f32 %v1632, 0.0
      %v2617 = vmax.f32 %v1637, 0.0
      %v2618 = vmax.f32 %v1640, 0.0
      %v2619 = vmax.f32 %v1645, 0.0
      %v2620 = vmax.f32 %v1648, 0.0
      %v2621 = vmax.f32 %v1653, 0.0
      %v2622 = vmax.f32 %v1656, 0.0
      %v2623 = vmax.f32 %v1661, 0.0
      %v2624 = vmax.f32 %v1664, 0.0
      %v2625 = vmax.f32 %v1669, 0.0
      %v2626 = vmax.f32 %v1672, 0.0
      %v2627 = vmax.f32 %v1677, 0.0
      %v2628 = vmax.f32 %v1680, 0.0
      %v2629 = vmax.f32 %v1685, 0.0
      %v2630 = vmax.f32 %v1688, 0.0
      %v2631 = vmax.f32 %v1693, 0.0
      %v2632 = vmax.f32 %v1696, 0.0
      %v2633 = vmax.f32 %v1701, 0.0
      %v2634 = vmax.f32 %v1704, 0.0
      %v2635 = vmax.f32 %v1709, 0.0
      %v2636 = vmax.f32 %v1712, 0.0
      %v2637 = vmax.f32 %v1717, 0.0
      %v2638 = vmax.f32 %v1720, 0.0
      %v2639 = vmax.f32 %v1725, 0.0
      %v2640 = vmax.f32 %v1728, 0.0
      %v2641 = vmax.f32 %v1733, 0.0
      %v2642 = vmax.f32 %v1736, 0.0
      %v2643 = vmax.f32 %v1741, 0.0
      %v2644 = vmax.f32 %v1744, 0.0
      %v2645 = vmax.f32 %v1749, 0.0
      %v2646 = vmax.f32 %v1752, 0.0
      %v2647 = vmax.f32 %v1757, 0.0
      %v2648 = vmax.f32 %v1760, 0.0
      %v2649 = vmax.f32 %v1765, 0.0
      %v2650 = vmax.f32 %v1768, 0.0
      %v2651 = vmax.f32 %v1773, 0.0
      %v2652 = vmax.f32 %v1776, 0.0
      %v2653 = vmax.f32 %v1781, 0.0
      %v2654 = vmax.f32 %v1784, 0.0
      %v2655 = vmax.f32 %v1789, 0.0
      %v2656 = vmax.f32 %v1792, 0.0
      %v2657 = vmax.f32 %v1797, 0.0
      %v2658 = vmax.f32 %v1800, 0.0
      %v2659 = vmax.f32 %v1805, 0.0
      %v2660 = vmax.f32 %v1808, 0.0
      %v2661 = vmax.f32 %v1813, 0.0
      %v2662 = vmax.f32 %v1816, 0.0
      %v2663 = vmax.f32 %v1821, 0.0
      %v2664 = vmax.f32 %v1824, 0.0
      %v2665 = vmax.f32 %v1829, 0.0
      %v2666 = vmax.f32 %v1832, 0.0
      %v2667 = vmax.f32 %v1837, 0.0
      %v2668 = vmax.f32 %v1840, 0.0
      %v2669 = vmax.f32 %v1845, 0.0
      %v2670 = vmax.f32 %v1848, 0.0
      %v2671 = vmax.f32 %v1853, 0.0
      %v2672 = vmax.f32 %v1856, 0.0
      %v2673 = vmax.f32 %v1861, 0.0
      %v2674 = vmax.f32 %v1864, 0.0
      %v2675 = vmax.f32 %v1869, 0.0
      %v2676 = vmax.f32 %v1872, 0.0
      %v2677 = vmax.f32 %v1877, 0.0
      %v2678 = vmax.f32 %v1880, 0.0
      %v2679 = vmax.f32 %v1885, 0.0
      %v2680 = vmax.f32 %v1888, 0.0
      %v2681 = vmax.f32 %v1893, 0.0
      %v2682 = vmax.f32 %v1896, 0.0
      %v2683 = vmax.f32 %v1901, 0.0
      %v2684 = vmax.f32 %v1904, 0.0
      %v2685 = vmax.f32 %v1909, 0.0
      %v2686 = vmax.f32 %v1912, 0.0
      %v2687 = vmax.f32 %v1917, 0.0
      %v2688 = vmax.f32 %v1920, 0.0
      %v2689 = vmax.f32 %v1925, 0.0
      %v2690 = vmax.f32 %v1928, 0.0
      %v2691 = vmax.f32 %v1933, 0.0
      %v2692 = vmax.f32 %v1936, 0.0
      %v2693 = vmax.f32 %v1941, 0.0
      %v2694 = vmax.f32 %v1944, 0.0
      %v2695 = vmax.f32 %v1949, 0.0
      %v2696 = vmax.f32 %v1952, 0.0
      %v2697 = vmax.f32 %v1957, 0.0
      %v2698 = vmax.f32 %v1960, 0.0
      %v2699 = vmax.f32 %v1965, 0.0
      %v2700 = vmax.f32 %v1968, 0.0
      %v2701 = vmax.f32 %v1973, 0.0
      %v2702 = vmax.f32 %v1976, 0.0
      %v2703 = vmax.f32 %v1981, 0.0
      %v2704 = vmax.f32 %v1984, 0.0
      %v2705 = vmax.f32 %v1989, 0.0
      %v2706 = vmax.f32 %v1992, 0.0
      %v2707 = vmax.f32 %v1997, 0.0
      %v2708 = vmax.f32 %v2000, 0.0
      %v2709 = vmax.f32 %v2005, 0.0
      %v2710 = vmax.f32 %v2008, 0.0
      %v2711 = vmax.f32 %v2013, 0.0
      %v2712 = vmax.f32 %v2016, 0.0
      %v2713 = vmax.f32 %v2021, 0.0
      %v2714 = vmax.f32 %v2024, 0.0
      %v2715 = vmax.f32 %v2029, 0.0
      %v2716 = vmax.f32 %v2032, 0.0
      %v2717 = vmax.f32 %v2037, 0.0
      %v2718 = vmax.f32 %v2040, 0.0
      %v2719 = vmax.f32 %v2045, 0.0
      %v2720 = vmax.f32 %v2048, 0.0
      %v2721 = vmax.f32 %v2053, 0.0
      %v2722 = vmax.f32 %v2056, 0.0
      %v2723 = vmax.f32 %v2061, 0.0
      %v2724 = vmax.f32 %v2064, 0.0
      %v2725 = vmax.f32 %v2069, 0.0
      %v2726 = vmax.f32 %v2072, 0.0
      %v2727 = vmax.f32 %v2077, 0.0
      %v2728 = vmax.f32 %v2080, 0.0
      %v2729 = vmax.f32 %v2085, 0.0
      %v2730 = vmax.f32 %v2088, 0.0
      %v2731 = vmax.f32 %v2093, 0.0
      %v2732 = vmax.f32 %v2096, 0.0
      %v2733 = vmax.f32 %v2101, 0.0
      %v2734 = vmax.f32 %v2104, 0.0
      %v2735 = vmax.f32 %v2109, 0.0
      %v2736 = vmax.f32 %v2112, 0.0
      %v2737 = vmax.f32 %v2117, 0.0
      %v2738 = vmax.f32 %v2120, 0.0
      %v2739 = vmax.f32 %v2125, 0.0
      %v2740 = vmax.f32 %v2128, 0.0
      %v2741 = vmax.f32 %v2133, 0.0
      %v2742 = vmax.f32 %v2136, 0.0
      %v2743 = vmax.f32 %v2141, 0.0
      %v2744 = vmax.f32 %v2144, 0.0
      %v2745 = vmax.f32 %v2149, 0.0
      %v2746 = vmax.f32 %v2152, 0.0
      %v2747 = vmax.f32 %v2157, 0.0
      %v2748 = vmax.f32 %v2160, 0.0
      %v2749 = vmax.f32 %v2165, 0.0
      %v2750 = vmax.f32 %v2168, 0.0
      %v2751 = vmax.f32 %v2173, 0.0
      %v2752 = vmax.f32 %v2176, 0.0
      %v2753 = vmax.f32 %v2181, 0.0
      %v2754 = vmax.f32 %v2184, 0.0
      %v2755 = vmax.f32 %v2189, 0.0
      %v2756 = vmax.f32 %v2192, 0.0
      %v2757 = vmax.f32 %v2197, 0.0
      %v2758 = vmax.f32 %v2200, 0.0
      %v2759 = vmax.f32 %v2205, 0.0
      %v2760 = vmax.f32 %v2208, 0.0
      %v2761 = vmax.f32 %v2213, 0.0
      %v2762 = vmax.f32 %v2216, 0.0
      %v2763 = vmax.f32 %v2221, 0.0
      %v2764 = vmax.f32 %v2224, 0.0
      %v2765 = vmax.f32 %v2229, 0.0
      %v2766 = vmax.f32 %v2232, 0.0
      %v2767 = vmax.f32 %v2237, 0.0
      %v2768 = vmax.f32 %v2240, 0.0
      %v2769 = vmax.f32 %v2245, 0.0
      %v2770 = vmax.f32 %v2248, 0.0
      %v2771 = vmax.f32 %v2253, 0.0
      %v2772 = vmax.f32 %v2256, 0.0
      %v2773 = vmax.f32 %v2261, 0.0
      %v2774 = vmax.f32 %v2264, 0.0
      %v2775 = vmax.f32 %v2269, 0.0
      %v2776 = vmax.f32 %v2272, 0.0
      %v2777 = vmax.f32 %v2277, 0.0
      %v2778 = vmax.f32 %v2280, 0.0
      %v2779 = vmax.f32 %v2285, 0.0
      %v2780 = vmax.f32 %v2288, 0.0
      %v2781 = vmax.f32 %v2293, 0.0
      %v2782 = vmax.f32 %v2296, 0.0
      %v2783 = vmax.f32 %v2301, 0.0
      %v2784 = vmax.f32 %v2304, 0.0
      %v2785 = vmax.f32 %v2309, 0.0
      %v2786 = vmax.f32 %v2312, 0.0
      %v2787 = vmax.f32 %v2317, 0.0
      %v2788 = vmax.f32 %v2320, 0.0
      %v2789 = vmax.f32 %v2325, 0.0
      %v2790 = vmax.f32 %v2328, 0.0
      %v2791 = vmax.f32 %v2333, 0.0
      %v2792 = vmax.f32 %v2336, 0.0
      %v2793 = vmax.f32 %v2341, 0.0
      %v2794 = vmax.f32 %v2344, 0.0
      %v2795 = vmax.f32 %v2349, 0.0
      %v2796 = vmax.f32 %v2352, 0.0
      %v2797 = vmax.f32 %v2357, 0.0
      %v2798 = vmax.f32 %v2360, 0.0
      %v2799 = vmax.f32 %v2365, 0.0
      %v2800 = vmax.f32 %v2368, 0.0
      %v2801 = vmax.f32 %v2373, 0.0
      %v2802 = vmax.f32 %v2376, 0.0
      %v2803 = vmax.f32 %v2381, 0.0
      %v2804 = vmax.f32 %v2384, 0.0
      %v2805 = vmax.f32 %v2389, 0.0
      %v2806 = vmax.f32 %v2392, 0.0
      %v2807 = vmax.f32 %v2397, 0.0
      %v2808 = vmax.f32 %v2400, 0.0
      %v2809 = vmax.f32 %v2405, 0.0
      %v2810 = vmax.f32 %v2408, 0.0
      %v2811 = vmax.f32 %v2413, 0.0
      %v2812 = vmax.f32 %v2416, 0.0
      %v2813 = vmax.f32 %v2421, 0.0
      %v2814 = vmax.f32 %v2424, 0.0
      %v2815 = vmax.f32 %v2429, 0.0
      %v2816 = vmax.f32 %v2432, 0.0
      %v2817 = vmax.f32 %v2437, 0.0
      %v2818 = vmax.f32 %v2440, 0.0
      %v2819 = vmax.f32 %v2445, 0.0
      %v2820 = vmax.f32 %v2448, 0.0
      %v2821 = vmax.f32 %v2453, 0.0
      %v2822 = vmax.f32 %v2456, 0.0
      %v2823 = vmax.f32 %v2461, 0.0
      %v2824 = vmax.f32 %v2464, 0.0
      %v2825 = vmax.f32 %v2469, 0.0
      %v2826 = vmax.f32 %v2472, 0.0
      %v2827 = vmax.f32 %v2477, 0.0
      %v2828 = vmax.f32 %v2480, 0.0
      %v2829 = vmax.f32 %v2485, 0.0
      %v2830 = vmax.f32 %v2488, 0.0
      %v2831 = vmax.f32 %v2493, 0.0
      %v2832 = vmax.f32 %v2496, 0.0
      %v2833 = vmax.f32 %v2501, 0.0
      %v2834 = vmax.f32 %v2504, 0.0
      %v2835 = vmax.f32 %v2509, 0.0
      %v2836 = vmax.f32 %v2512, 0.0
      %v2837 = vmax.f32 %v2517, 0.0
      %v2838 = vmax.f32 %v2520, 0.0
      %v2839 = vmax.f32 %v2525, 0.0
      %v2840 = vmax.f32 %v2528, 0.0
      %v2841 = vmax.f32 %v2533, 0.0
      %v2842 = vmax.f32 %v2536, 0.0
      %v2843 = vmax.f32 %v2541, 0.0
      %v2844 = vmax.f32 %v2544, 0.0
      %v2845 = vmax.f32 %v2549, 0.0
      %v2846 = vmax.f32 %v2552, 0.0
      %v2847 = vmax.f32 %v2557, 0.0
      %v2848 = vmax.f32 %v2560, 0.0
      %v2849 = vmax.f32 %v2565, 0.0
      %v2850 = vmax.f32 %v2568, 0.0
      %v2851 = vmax.f32 %v2573, 0.0
      %v2852 = vmax.f32 %v2576, 0.0
      %v2853 = vmax.f32 %v2581, 0.0
      %v2854 = vmax.f32 %v2584, 0.0
      %v2855 = vmax.f32 %v2589, 0.0
      %v2856 = vmax.f32 %v2592, 0.0
      %v2857 = vmax.f32 %v2597, 0.0
      %v2858 = vmax.f32 %v2600, 0.0
      %v2859 = vadd.f32 %v2603, %v2604
      %v2860 = vadd.f32 %v2859, %v2605
      %v2861 = vadd.f32 %v2860, %v2606
      %v2862 = vadd.f32 %v2861, %v2607
      %v2863 = vadd.f32 %v2862, %v2608
      %v2864 = vadd.f32 %v2863, %v2609
      %v2865 = vadd.f32 %v2864, %v2610
      %v2866 = vadd.f32 %v2865, %v2611
      %v2867 = vadd.f32 %v2866, %v2612
      %v2868 = vadd.f32 %v2867, %v2613
      %v2869 = vadd.f32 %v2868, %v2614
      %v2870 = vadd.f32 %v2869, %v2615
      %v2871 = vadd.f32 %v2870, %v2616
      %v2872 = vadd.f32 %v2871, %v2617
      %v2873 = vadd.f32 %v2872, %v2618
      %v2874 = vadd.f32 %v2873, %v2619
      %v2875 = vadd.f32 %v2874, %v2620
      %v2876 = vadd.f32 %v2875, %v2621
      %v2877 = vadd.f32 %v2876, %v2622
      %v2878 = vadd.f32 %v2877, %v2623
      %v2879 = vadd.f32 %v2878, %v2624
      %v2880 = vadd.f32 %v2879, %v2625
      %v2881 = vadd.f32 %v2880, %v2626
      %v2882 = vadd.f32 %v2881, %v2627
      %v2883 = vadd.f32 %v2882, %v2628
      %v2884 = vadd.f32 %v2883, %v2629
      %v2885 = vadd.f32 %v2884, %v2630
      %v2886 = vadd.f32 %v2885, %v2631
      %v2887 = vadd.f32 %v2886, %v2632
      %v2888 = vadd.f32 %v2887, %v2633
      %v2889 = vadd.f32 %v2888, %v2634
      %v2890 = vrot.slane %v2889, 4
      %v2891 = vadd.f32 %v2889, %v2890
      %v2892 = vrot.slane %v2891, 2
      %v2893 = vadd.f32 %v2891, %v2892
      %v2894 = vrot.slane %v2893, 1
      %v2895 = vadd.f32 %v2893, %v2894
      %v2896 = vadd.f32 %v2635, %v2636
      %v2897 = vadd.f32 %v2896, %v2637
      %v2898 = vadd.f32 %v2897, %v2638
      %v2899 = vadd.f32 %v2898, %v2639
      %v2900 = vadd.f32 %v2899, %v2640
      %v2901 = vadd.f32 %v2900, %v2641
      %v2902 = vadd.f32 %v2901, %v2642
      %v2903 = vadd.f32 %v2902, %v2643
      %v2904 = vadd.f32 %v2903, %v2644
      %v2905 = vadd.f32 %v2904, %v2645
      %v2906 = vadd.f32 %v2905, %v2646
      %v2907 = vadd.f32 %v2906, %v2647
      %v2908 = vadd.f32 %v2907, %v2648
      %v2909 = vadd.f32 %v2908, %v2649
      %v2910 = vadd.f32 %v2909, %v2650
      %v2911 = vadd.f32 %v2910, %v2651
      %v2912 = vadd.f32 %v2911, %v2652
      %v2913 = vadd.f32 %v2912, %v2653
      %v2914 = vadd.f32 %v2913, %v2654
      %v2915 = vadd.f32 %v2914, %v2655
      %v2916 = vadd.f32 %v2915, %v2656
      %v2917 = vadd.f32 %v2916, %v2657
      %v2918 = vadd.f32 %v2917, %v2658
      %v2919 = vadd.f32 %v2918, %v2659
      %v2920 = vadd.f32 %v2919, %v2660
      %v2921 = vadd.f32 %v2920, %v2661
      %v2922 = vadd.f32 %v2921, %v2662
      %v2923 = vadd.f32 %v2922, %v2663
      %v2924 = vadd.f32 %v2923, %v2664
      %v2925 = vadd.f32 %v2924, %v2665
      %v2926 = vadd.f32 %v2925, %v2666
      %v2927 = vrot.slane %v2926, 4
      %v2928 = vadd.f32 %v2926, %v2927
      %v2929 = vrot.slane %v2928, 2
      %v2930 = vadd.f32 %v2928, %v2929
      %v2931 = vrot.slane %v2930, 1
      %v2932 = vadd.f32 %v2930, %v2931
      %v2933 = vadd.f32 %v2667, %v2668
      %v2934 = vadd.f32 %v2933, %v2669
      %v2935 = vadd.f32 %v2934, %v2670
      %v2936 = vadd.f32 %v2935, %v2671
      %v2937 = vadd.f32 %v2936, %v2672
      %v2938 = vadd.f32 %v2937, %v2673
      %v2939 = vadd.f32 %v2938, %v2674
      %v2940 = vadd.f32 %v2939, %v2675
      %v2941 = vadd.f32 %v2940, %v2676
      %v2942 = vadd.f32 %v2941, %v2677
      %v2943 = vadd.f32 %v2942, %v2678
      %v2944 = vadd.f32 %v2943, %v2679
      %v2945 = vadd.f32 %v2944, %v2680
      %v2946 = vadd.f32 %v2945, %v2681
      %v2947 = vadd.f32 %v2946, %v2682
      %v2948 = vadd.f32 %v2947, %v2683
      %v2949 = vadd.f32 %v2948, %v2684
      %v2950 = vadd.f32 %v2949, %v2685
      %v2951 = vadd.f32 %v2950, %v2686
      %v2952 = vadd.f32 %v2951, %v2687
      %v2953 = vadd.f32 %v2952, %v2688
      %v2954 = vadd.f32 %v2953, %v2689
      %v2955 = vadd.f32 %v2954, %v2690
      %v2956 = vadd.f32 %v2955, %v2691
      %v2957 = vadd.f32 %v2956, %v2692
      %v2958 = vadd.f32 %v2957, %v2693
      %v2959 = vadd.f32 %v2958, %v2694
      %v2960 = vadd.f32 %v2959, %v2695
      %v2961 = vadd.f32 %v2960, %v2696
      %v2962 = vadd.f32 %v2961, %v2697
      %v2963 = vadd.f32 %v2962, %v2698
      %v2964 = vrot.slane %v2963, 4
      %v2965 = vadd.f32 %v2963, %v2964
      %v2966 = vrot.slane %v2965, 2
      %v2967 = vadd.f32 %v2965, %v2966
      %v2968 = vrot.slane %v2967, 1
      %v2969 = vadd.f32 %v2967, %v2968
      %v2970 = vadd.f32 %v2699, %v2700
      %v2971 = vadd.f32 %v2970, %v2701
      %v2972 = vadd.f32 %v2971, %v2702
      %v2973 = vadd.f32 %v2972, %v2703
      %v2974 = vadd.f32 %v2973, %v2704
      %v2975 = vadd.f32 %v2974, %v2705
      %v2976 = vadd.f32 %v2975, %v2706
      %v2977 = vadd.f32 %v2976, %v2707
      %v2978 = vadd.f32 %v2977, %v2708
      %v2979 = vadd.f32 %v2978, %v2709
      %v2980 = vadd.f32 %v2979, %v2710
      %v2981 = vadd.f32 %v2980, %v2711
      %v2982 = vadd.f32 %v2981, %v2712
      %v2983 = vadd.f32 %v2982, %v2713
      %v2984 = vadd.f32 %v2983, %v2714
      %v2985 = vadd.f32 %v2984, %v2715
      %v2986 = vadd.f32 %v2985, %v2716
      %v2987 = vadd.f32 %v2986, %v2717
      %v2988 = vadd.f32 %v2987, %v2718
      %v2989 = vadd.f32 %v2988, %v2719
      %v2990 = vadd.f32 %v2989, %v2720
      %v2991 = vadd.f32 %v2990, %v2721
      %v2992 = vadd.f32 %v2991, %v2722
      %v2993 = vadd.f32 %v2992, %v2723
      %v2994 = vadd.f32 %v2993, %v2724
      %v2995 = vadd.f32 %v2994, %v2725
      %v2996 = vadd.f32 %v2995, %v2726
      %v2997 = vadd.f32 %v2996, %v2727
      %v2998 = vadd.f32 %v2997, %v2728
      %v2999 = vadd.f32 %v2998, %v2729
      %v3000 = vadd.f32 %v2999, %v2730
      %v3001 = vrot.slane %v3000, 4
      %v3002 = vadd.f32 %v3000, %v3001
      %v3003 = vrot.slane %v3002, 2
      %v3004 = vadd.f32 %v3002, %v3003
      %v3005 = vrot.slane %v3004, 1
      %v3006 = vadd.f32 %v3004, %v3005
      %v3007 = vadd.f32 %v2731, %v2732
      %v3008 = vadd.f32 %v3007, %v2733
      %v3009 = vadd.f32 %v3008, %v2734
      %v3010 = vadd.f32 %v3009, %v2735
      %v3011 = vadd.f32 %v3010, %v2736
      %v3012 = vadd.f32 %v3011, %v2737
      %v3013 = vadd.f32 %v3012, %v2738
      %v3014 = vadd.f32 %v3013, %v2739
      %v3015 = vadd.f32 %v3014, %v2740
      %v3016 = vadd.f32 %v3015, %v2741
      %v3017 = vadd.f32 %v3016, %v2742
      %v3018 = vadd.f32 %v3017, %v2743
      %v3019 = vadd.f32 %v3018, %v2744
      %v3020 = vadd.f32 %v3019, %v2745
      %v3021 = vadd.f32 %v3020, %v2746
      %v3022 = vadd.f32 %v3021, %v2747
      %v3023 = vadd.f32 %v3022, %v2748
      %v3024 = vadd.f32 %v3023, %v2749
      %v3025 = vadd.f32 %v3024, %v2750
      %v3026 = vadd.f32 %v3025, %v2751
      %v3027 = vadd.f32 %v3026, %v2752
      %v3028 = vadd.f32 %v3027, %v2753
      %v3029 = vadd.f32 %v3028, %v2754
      %v3030 = vadd.f32 %v3029, %v2755
      %v3031 = vadd.f32 %v3030, %v2756
      %v3032 = vadd.f32 %v3031, %v2757
      %v3033 = vadd.f32 %v3032, %v2758
      %v3034 = vadd.f32 %v3033, %v2759
      %v3035 = vadd.f32 %v3034, %v2760
      %v3036 = vadd.f32 %v3035, %v2761
      %v3037 = vadd.f32 %v3036, %v2762
      %v3038 = vrot.slane %v3037, 4
      %v3039 = vadd.f32 %v3037, %v3038
      %v3040 = vrot.slane %v3039, 2
      %v3041 = vadd.f32 %v3039, %v3040
      %v3042 = vrot.slane %v3041, 1
      %v3043 = vadd.f32 %v3041, %v3042
      %v3044 = vadd.f32 %v2763, %v2764
      %v3045 = vadd.f32 %v3044, %v2765
      %v3046 = vadd.f32 %v3045, %v2766
      %v3047 = vadd.f32 %v3046, %v2767
      %v3048 = vadd.f32 %v3047, %v2768
      %v3049 = vadd.f32 %v3048, %v2769
      %v3050 = vadd.f32 %v3049, %v2770
      %v3051 = vadd.f32 %v3050, %v2771
      %v3052 = vadd.f32 %v3051, %v2772
      %v3053 = vadd.f32 %v3052, %v2773
      %v3054 = vadd.f32 %v3053, %v2774
      %v3055 = vadd.f32 %v3054, %v2775
      %v3056 = vadd.f32 %v3055, %v2776
      %v3057 = vadd.f32 %v3056, %v2777
      %v3058 = vadd.f32 %v3057, %v2778
      %v3059 = vadd.f32 %v3058, %v2779
      %v3060 = vadd.f32 %v3059, %v2780
      %v3061 = vadd.f32 %v3060, %v2781
      %v3062 = vadd.f32 %v3061, %v2782
      %v3063 = vadd.f32 %v3062, %v2783
      %v3064 = vadd.f32 %v3063, %v2784
      %v3065 = vadd.f32 %v3064, %v2785
      %v3066 = vadd.f32 %v3065, %v2786
      %v3067 = vadd.f32 %v3066, %v2787
      %v3068 = vadd.f32 %v3067, %v2788
      %v3069 = vadd.f32 %v3068, %v2789
      %v3070 = vadd.f32 %v3069, %v2790
      %v3071 = vadd.f32 %v3070, %v2791
      %v3072 = vadd.f32 %v3071, %v2792
      %v3073 = vadd.f32 %v3072, %v2793
      %v3074 = vadd.f32 %v3073, %v2794
      %v3075 = vrot.slane %v3074, 4
      %v3076 = vadd.f32 %v3074, %v3075
      %v3077 = vrot.slane %v3076, 2
      %v3078 = vadd.f32 %v3076, %v3077
      %v3079 = vrot.slane %v3078, 1
      %v3080 = vadd.f32 %v3078, %v3079
      %v3081 = vadd.f32 %v2795, %v2796
      %v3082 = vadd.f32 %v3081, %v2797
      %v3083 = vadd.f32 %v3082, %v2798
      %v3084 = vadd.f32 %v3083, %v2799
      %v3085 = vadd.f32 %v3084, %v2800
      %v3086 = vadd.f32 %v3085, %v2801
      %v3087 = vadd.f32 %v3086, %v2802
      %v3088 = vadd.f32 %v3087, %v2803
      %v3089 = vadd.f32 %v3088, %v2804
      %v3090 = vadd.f32 %v3089, %v2805
      %v3091 = vadd.f32 %v3090, %v2806
      %v3092 = vadd.f32 %v3091, %v2807
      %v3093 = vadd.f32 %v3092, %v2808
      %v3094 = vadd.f32 %v3093, %v2809
      %v3095 = vadd.f32 %v3094, %v2810
      %v3096 = vadd.f32 %v3095, %v2811
      %v3097 = vadd.f32 %v3096, %v2812
      %v3098 = vadd.f32 %v3097, %v2813
      %v3099 = vadd.f32 %v3098, %v2814
      %v3100 = vadd.f32 %v3099, %v2815
      %v3101 = vadd.f32 %v3100, %v2816
      %v3102 = vadd.f32 %v3101, %v2817
      %v3103 = vadd.f32 %v3102, %v2818
      %v3104 = vadd.f32 %v3103, %v2819
      %v3105 = vadd.f32 %v3104, %v2820
      %v3106 = vadd.f32 %v3105, %v2821
      %v3107 = vadd.f32 %v3106, %v2822
      %v3108 = vadd.f32 %v3107, %v2823
      %v3109 = vadd.f32 %v3108, %v2824
      %v3110 = vadd.f32 %v3109, %v2825
      %v3111 = vadd.f32 %v3110, %v2826
      %v3112 = vrot.slane %v3111, 4
      %v3113 = vadd.f32 %v3111, %v3112
      %v3114 = vrot.slane %v3113, 2
      %v3115 = vadd.f32 %v3113, %v3114
      %v3116 = vrot.slane %v3115, 1
      %v3117 = vadd.f32 %v3115, %v3116
      %v3118 = vadd.f32 %v2827, %v2828
      %v3119 = vadd.f32 %v3118, %v2829
      %v3120 = vadd.f32 %v3119, %v2830
      %v3121 = vadd.f32 %v3120, %v2831
      %v3122 = vadd.f32 %v3121, %v2832
      %v3123 = vadd.f32 %v3122, %v2833
      %v3124 = vadd.f32 %v3123, %v2834
      %v3125 = vadd.f32 %v3124, %v2835
      %v3126 = vadd.f32 %v3125, %v2836
      %v3127 = vadd.f32 %v3126, %v2837
      %v3128 = vadd.f32 %v3127, %v2838
      %v3129 = vadd.f32 %v3128, %v2839
      %v3130 = vadd.f32 %v3129, %v2840
      %v3131 = vadd.f32 %v3130, %v2841
      %v3132 = vadd.f32 %v3131, %v2842
      %v3133 = vadd.f32 %v3132, %v2843
      %v3134 = vadd.f32 %v3133, %v2844
      %v3135 = vadd.f32 %v3134, %v2845
      %v3136 = vadd.f32 %v3135, %v2846
      %v3137 = vadd.f32 %v3136, %v2847
      %v3138 = vadd.f32 %v3137, %v2848
      %v3139 = vadd.f32 %v3138, %v2849
      %v3140 = vadd.f32 %v3139, %v2850
      %v3141 = vadd.f32 %v3140, %v2851
      %v3142 = vadd.f32 %v3141, %v2852
      %v3143 = vadd.f32 %v3142, %v2853
      %v3144 = vadd.f32 %v3143, %v2854
      %v3145 = vadd.f32 %v3144, %v2855
      %v3146 = vadd.f32 %v3145, %v2856
      %v3147 = vadd.f32 %v3146, %v2857
      %v3148 = vadd.f32 %v3147, %v2858
      %v3149 = vrot.slane %v3148, 4
      %v3150 = vadd.f32 %v3148, %v3149
      %v3151 = vrot.slane %v3150, 2
      %v3152 = vadd.f32 %v3150, %v3151
      %v3153 = vrot.slane %v3152, 1
      %v3154 = vadd.f32 %v3152, %v3153
      %v3155 = vmul.f32 %v2895, 0.00390625
      %v3156 = vmul.f32 %v2932, 0.00390625
      %v3157 = vmul.f32 %v2969, 0.00390625
      %v3158 = vmul.f32 %v3006, 0.00390625
      %v3159 = vmul.f32 %v3043, 0.00390625
      %v3160 = vmul.f32 %v3080, 0.00390625
      %v3161 = vmul.f32 %v3117, 0.00390625
      %v3162 = vmul.f32 %v3154, 0.00390625
      %v3163 = vpack.c.bf16 %v3155, %v3155
      %v3164 = vpack.c.bf16 %v3156, %v3156
      %v3165 = vpack.c.bf16 %v3157, %v3157
      %v3166 = vpack.c.bf16 %v3158, %v3158
      %v3167 = vpack.c.bf16 %v3159, %v3159
      %v3168 = vpack.c.bf16 %v3160, %v3160
      %v3169 = vpack.c.bf16 %v3161, %v3161
      %v3170 = vpack.c.bf16 %v3162, %v3162
      %v3171 = vld [vmem:[%s240] sm:$0xf]
      %v3172 = vld [vmem:[%s240 + $0x4] sm:$0xf]
      %v3173 = vld [vmem:[%s240 + $0x8] sm:$0xf]
      %v3174 = vld [vmem:[%s240 + $0xc] sm:$0xf]
      %v3175 = vld [vmem:[%s240 + $0x10] sm:$0xf]
      %v3176 = vld [vmem:[%s240 + $0x14] sm:$0xf]
      %v3177 = vld [vmem:[%s240 + $0x18] sm:$0xf]
      %v3178 = vld [vmem:[%s240 + $0x1c] sm:$0xf]
      %v3179 = vld [vmem:[%s240 + $0x20] sm:$0xf]
      %v3180 = vld [vmem:[%s240 + $0x24] sm:$0xf]
      %v3181 = vld [vmem:[%s240 + $0x28] sm:$0xf]
      %v3182 = vld [vmem:[%s240 + $0x2c] sm:$0xf]
      %v3183 = vld [vmem:[%s240 + $0x30] sm:$0xf]
      %v3184 = vld [vmem:[%s240 + $0x34] sm:$0xf]
      %v3185 = vld [vmem:[%s240 + $0x38] sm:$0xf]
      %v3186 = vld [vmem:[%s240 + $0x3c] sm:$0xf]
      %v3195 = vunpack.c.l.b16 %v3163
      %v3196 = vunpack.c.l.b16 %v3164
      %v3197 = vunpack.c.l.b16 %v3165
      %v3198 = vunpack.c.l.b16 %v3166
      %v3199 = vunpack.c.l.b16 %v3167
      %v3200 = vunpack.c.l.b16 %v3168
      %v3201 = vunpack.c.l.b16 %v3169
      %v3202 = vunpack.c.l.b16 %v3170
      %vm3203 = vcmask 1041409
      %v3204 = vsel %vm3203, %v3196, %v3195
      %vm3205 = vcmask 1042434
      %v3206 = vsel %vm3205, %v3197, %v3204
      %vm3207 = vcmask 1043459
      %v3208 = vsel %vm3207, %v3198, %v3206
      %vm3209 = vcmask 1044484
      %v3210 = vsel %vm3209, %v3199, %v3208
      %vm3211 = vcmask 1045509
      %v3212 = vsel %vm3211, %v3200, %v3210
      %vm3213 = vcmask 1046534
      %v3214 = vsel %vm3213, %v3201, %v3212
      %vm3215 = vcmask 1047559
      %v3216 = vsel %vm3215, %v3202, %v3214
      %v3217 = vpack.c.b16 %v3216, %v3216
      %v3235 = vunpack.c.l.b16 %v3171
      %v3236 = vunpack.c.l.b16 %v3172
      %v3237 = vunpack.c.l.b16 %v3173
      %v3238 = vunpack.c.l.b16 %v3174
      %v3239 = vunpack.c.l.b16 %v3175
      %v3240 = vunpack.c.l.b16 %v3176
      %v3241 = vunpack.c.l.b16 %v3177
      %v3242 = vunpack.c.l.b16 %v3178
      %v3243 = vunpack.c.l.b16 %v3179
      %v3244 = vunpack.c.l.b16 %v3180
      %v3245 = vunpack.c.l.b16 %v3181
      %v3246 = vunpack.c.l.b16 %v3182
      %v3247 = vunpack.c.l.b16 %v3183
      %v3248 = vunpack.c.l.b16 %v3184
      %v3249 = vunpack.c.l.b16 %v3185
      %v3250 = vunpack.c.l.b16 %v3186
      %v3251 = vpack.c.b16 %v3236, %v3235
      %v3252 = vpack.c.b16 %v3238, %v3237
      %v3253 = vpack.c.b16 %v3240, %v3239
      %v3254 = vpack.c.b16 %v3242, %v3241
      %v3255 = vpack.c.b16 %v3244, %v3243
      %v3256 = vpack.c.b16 %v3246, %v3245
      %v3257 = vpack.c.b16 %v3248, %v3247
      %v3258 = vpack.c.b16 %v3250, %v3249
      %3267 = vmatprep.subr.bf16.mxu0 0
      %3268 = vmatpush1.bf16.msra.mxu0 %v3258
      %3269 = vmatprep.subr.bf16.mxu0 0
      %3270 = vmatpush1.bf16.msra.mxu0 %v3257
      %3271 = vmatprep.subr.bf16.mxu0 0
      %3272 = vmatpush1.bf16.msra.mxu0 %v3256
      %3273 = vmatprep.subr.bf16.mxu0 0
      %3274 = vmatpush1.bf16.msra.mxu0 %v3255
      %3275 = vmatprep.subr.bf16.mxu0 0
      %3276 = vmatpush1.bf16.msra.mxu0 %v3254
      %3277 = vmatprep.subr.bf16.mxu0 0
      %3278 = vmatpush1.bf16.msra.mxu0 %v3253
      %3279 = vmatprep.subr.bf16.mxu0 0
      %3280 = vmatpush1.bf16.msra.mxu0 %v3252
      %3281 = vmatprep.subr.bf16.mxu0 0
      %3282 = vmatpush1.bf16.msra.mxu0 %v3251
      %3283 = vmatprep.subr.bf16.mxu0 0
      %3284 = vmatpush2.bf16.msra.mxu0 0
      %3285 = vmatprep.subr.bf16.mxu0 0
      %3286 = vmatpush2.bf16.msra.mxu0 0
      %3287 = vmatprep.subr.bf16.mxu0 0
      %3288 = vmatpush2.bf16.msra.mxu0 0
      %3289 = vmatprep.subr.bf16.mxu0 0
      %3290 = vmatpush2.bf16.msra.mxu0 0
      %3291 = vmatprep.subr.bf16.mxu0 0
      %3292 = vmatpush2.bf16.msra.mxu0 0
      %3293 = vmatprep.subr.bf16.mxu0 0
      %3294 = vmatpush2.bf16.msra.mxu0 0
      %3295 = vmatprep.subr.bf16.mxu0 0
      %3296 = vmatpush2.bf16.msra.mxu0 0
      %3297 = vmatprep.subr.bf16.mxu0 0
      %3298 = vmatpush2.bf16.msra.mxu0 0
      %3299 = vmatprep.mubr.bf16.mxu0 0
      %3300 = vmatmul.mubr.bf16.gmra.mxu0 %v3217
      %v3301 = vpop.f32.mrf.mxu0
      %v3302 = vadd.f32 0.0, %v3301
      %v3303 = vpop.f32.mrf.mxu0
      %v3304 = vpop.f32.mrf.mxu0
      %v3305 = vpop.f32.mrf.mxu0
      %3306 = vdwg.mxu0
      %3307 = vst [vmem:[%s247] sm:$0xff] %v3302
      %p3308 = scmp.lt.s32.totalorder %s19, 1
      %s3309 = scalar_select %p3308, %s19, 1
      %p3310 = scmp.lt.s32.totalorder %s18, 0
      %s3311 = scalar_select %p3310, %s18, 0
      %s3312 = sadd.s32 %s3311, %s3309
      %s3313 = smul.addr %s3312, 8
      %s3314 = scalar_lea.vmem %s3, %s3313
      // Predicated region
      $region33: #{two_branch_forward.1} parent=31 // pred_check
        %p3315 = pneg %p126
      $region34: #{two_branch_forward.1} parent=31 // pred_check_branch
        %3317 = sbr.rel (%p3315) target = $region36
      $region35: #{two_branch_forward.1} parent=31 // pred_region
        _
      $region36: #{two_branch_forward.1} parent=31 // pred_fallthru
        _
    $region32: #{two_branch_forward.1} parent=5 // pred_fallthru
      _
    %p3318 = scmp.le.s32.totalorder 2, %s9
    // Predicated region
    $region37: #{two_branch_forward.1} parent=5 // pred_check
      %p3319 = pneg %p3318
    $region38: #{two_branch_forward.1} parent=5 // pred_check_branch
      %3321 = sbr.rel (%p3319) target = $region40
    $region39: #{two_branch_forward.1} parent=5 // pred_region
      %s3322 = ssub.s32 %s9, 2
      // Predicated region
      $region41: #{two_branch_forward.1} parent=39 // pred_check
        %p3323 = pneg %p132
      $region42: #{two_branch_forward.1} parent=39 // pred_check_branch
        %3325 = sbr.rel (%p3323) target = $region44
      $region43: #{two_branch_forward.1} parent=39 // pred_region
        %p3326 = scmp.lt.s32.totalorder %s21, 1
        %s3327 = scalar_select %p3326, %s21, 1
        %p3328 = scmp.lt.s32.totalorder %s20, 0
        %s3329 = scalar_select %p3328, %s20, 0
        %s3330 = sadd.s32 %s3329, %s3327
        %s3331 = smul.addr %s3330, 8
        %s3332 = scalar_lea.vmem %s3, %s3331
      $region44: #{two_branch_forward.1} parent=39 // pred_fallthru
        _
    $region40: #{two_branch_forward.1} parent=5 // pred_fallthru
      _
  $region6: #{two_branch_forward.1} parent=0 // loop_footer
    %s13 = sadd.s32 1, %s9
  $region7: #{two_branch_forward.1} parent=0 // loop_footer_branch
    %8 = sbr.rel target = $region3
  $region8: #{two_branch_forward.1} parent=0 // loop_exit
    _

</llo_original>
